<compile_context>
chip_gen: v5e
topology: v5e:2x2
jax: 0.10.0
libtpu: 0.0.40
codegen_flags: <defaults>
</compile_context>

<pallas_src>
import functools

import jax
import jax.numpy as jnp
from jax import lax
from jax.experimental import pallas as pl
from jax.experimental.pallas import tpu as pltpu


LANES = 128


def _round_up(x, m):
    return (x + m - 1) // m * m


def _vmem_limit_bytes():
    """Scoped VMEM limit derived from the actual chip (64 MiB v7x, 128 MiB v5e/v6e)."""
    cap = 64 * 1024 * 1024
    try:
        info = pltpu.get_tpu_info()
        cap = int(getattr(info, "vmem_capacity_bytes", cap))
    except Exception:
        pass
    # Leave headroom for compiler-internal scratch; cap well under physical.
    return max(32 * 1024 * 1024, min(cap * 3 // 4, 112 * 1024 * 1024))


def _pick_block_h(Ho, Wo, Wp, Cin, Cp, KH, KW, n_batch, vmem_limit):
    """Largest divisor of Ho whose per-step VMEM footprint fits the budget."""
    bytes_per_row = (
        2 * 2 * Wp * Cin          # lo activation block (2 pipeline buffers, bf16)
        + 2 * Wp * Cin            # slab scratch (bf16)
        + 2 * 2 * Wo * Cp         # conv-out block (2 pipeline buffers, bf16)
        + 2 * 4 * Wo * Cp         # f32 accumulator value + temporaries
        + 2 * Wo * Cin            # current tap operand (bf16)
    )
    fixed = (
        2 * 2 * KH * KW * Cin * Cp            # weight block (2 buffers, bf16)
        + 2 * 2 * max(KH - 1, 0) * Wp * Cin   # halo row windows (2 buffers each)
        + (2 << 20)                           # misc slack
    )
    budget = vmem_limit // 2
    max_rows = max(1, (budget - fixed) // max(1, bytes_per_row))
    cap = Ho
    if n_batch == 1 and Ho >= 2:
        cap = max(1, Ho // 2)     # keep >=2 parallel grid steps (v7x has 2 TCs)
    target = max(1, min(Ho, max_rows, cap, 128))
    best = 1
    for bh in range(1, Ho + 1):
        if Ho % bh == 0 and bh <= target:
            best = bh
    return best


def _make_halo_index_map(block_h, j):
    # Single halo row j of the next row block: element row (i+1)*block_h + j.
    return lambda n, i: (n, (i + 1) * block_h + j, 0, 0)


# ---------------------------------------------------------------------------
# Pass 1: convolution (per-tap MXU matmuls, bf16 x bf16 -> f32) + per-tile
#         BN statistics (sum and centered second moment) from the f32 acc.
# ---------------------------------------------------------------------------
def _make_conv_stats_kernel(KH, KW, Cin, Wo, Cp, block_h):
    n_halo = KH - 1
    TH = block_h
    M = TH * Wo

    def kernel(*refs):
        x_lo_ref = refs[0]                       # (block_h, Wp, Cin)      bf16
        halo_refs = refs[1:1 + n_halo]           # (1, Wp, Cin) each       bf16
        w_ref = refs[1 + n_halo]                 # (KH*KW, Cin, Cp)        bf16
        conv_ref = refs[2 + n_halo]              # (block_h, Wo, Cp)       bf16
        sum_ref = refs[3 + n_halo]               # (1, Cp)                 f32
        m2_ref = refs[4 + n_halo]                # (1, Cp)                 f32
        slab_ref = refs[5 + n_halo]              # (block_h+KH-1, Wp, Cin) bf16

        # Assemble the halo'd row slab in VMEM scratch (no HBM materialization).
        slab_ref[0:TH] = x_lo_ref[...]
        for j in range(n_halo):
            slab_ref[TH + j] = halo_refs[j][0]

        # KH*KW tap matmuls on the MXU, accumulated in f32.
        acc = jnp.zeros((M, Cp), jnp.float32)
        for kh in range(KH):
            for kw in range(KW):
                piece = slab_ref[kh:kh + TH, kw:kw + Wo, :].reshape(M, Cin)
                acc = acc + jnp.dot(piece, w_ref[kh * KW + kw],
                                    preferred_element_type=jnp.float32)

        # bf16 intermediate (stats taken from the f32 accumulator below).
        conv_ref[...] = acc.reshape(TH, Wo, Cp).astype(conv_ref.dtype)

        # Per-tile sum and centered second moment -> numerically stable
        # Welford/Chan combine across tiles in the wrapper.
        s = jnp.sum(acc, axis=0, keepdims=True)
        mu = s * (1.0 / M)
        d = acc - mu
        sum_ref[...] = s
        m2_ref[...] = jnp.sum(d * d, axis=0, keepdims=True)

    return kernel


# ---------------------------------------------------------------------------
# Pass 2: y = conv * scale + shift (BN folded into two per-channel constants),
#         writing only the real Cout channels.
# ---------------------------------------------------------------------------
def _bn_apply_kernel(conv_ref, scale_ref, shift_ref, o_ref):
    TH, Wo, Cout = o_ref.shape
    conv = conv_ref[:, :, 0:Cout].astype(jnp.float32)
    scale = scale_ref[...].reshape(1, 1, Cout)
    shift = shift_ref[...].reshape(1, 1, Cout)
    o_ref[...] = (conv * scale + shift).astype(o_ref.dtype)


def conv_bn2d(x_nchw, weight_oihw, gamma, beta, *, padding=(1, 1), eps=1e-5,
              block_h=None):
    """Fused Conv2d(bias=False, stride=1) + BatchNorm2d(training) forward."""
    N, Cin, H, W = x_nchw.shape
    Cout, Cin_w, KH, KW = weight_oihw.shape
    assert Cin == Cin_w
    ph, pw = padding
    Ho = H + 2 * ph - KH + 1
    Wo = W + 2 * pw - KW + 1
    Hp = Ho + KH - 1
    Wp = Wo + KW - 1
    Cp = _round_up(Cout, LANES)           # lane-dense channels for the matmul
    n_halo = KH - 1

    vmem_limit = _vmem_limit_bytes()
    if block_h is None:
        block_h = _pick_block_h(Ho, Wo, Wp, Cin, Cp, KH, KW, N, vmem_limit)
    assert Ho % block_h == 0, (Ho, block_h)
    n_hb = Ho // block_h

    # Single prep pass: NHWC + bf16 + spatial zero-padding.  No im2col and no
    # halo-slab stacking -- pass 1 reads this array directly (halo rows via
    # extra single-row BlockSpec windows of the SAME array).
    # TODO(synk): with an NHWC end-to-end pipeline the NCHW<->NHWC transposes
    # would disappear entirely.
    x_pad = jnp.pad(
        jnp.transpose(x_nchw, (0, 2, 3, 1)).astype(jnp.bfloat16),
        ((0, 0), (ph, ph), (pw, pw), (0, 0)))          # (N, Hp, Wp, Cin)

    # Weights: (KH*KW, Cin, Cp) bf16, Cout zero-padded to a lane multiple.
    w = jnp.transpose(weight_oihw, (2, 3, 1, 0))       # (KH, KW, Cin, Cout)
    w = jnp.pad(w, ((0, 0), (0, 0), (0, 0), (0, Cp - Cout)))
    w = w.reshape(KH * KW, Cin, Cp).astype(jnp.bfloat16)

    grid = (N, n_hb)
    compiler_params = pltpu.CompilerParams(
        dimension_semantics=("parallel", "parallel"),  # megacore-shard N / rows
        vmem_limit_bytes=vmem_limit,
    )

    x_lo_spec = pl.BlockSpec((None, block_h, Wp, Cin), lambda n, i: (n, i, 0, 0))
    halo_specs = [
        pl.BlockSpec((None, 1, Wp, Cin), _make_halo_index_map(block_h, j))
        for j in range(n_halo)
    ]
    w_spec = pl.BlockSpec((KH * KW, Cin, Cp), lambda n, i: (0, 0, 0))
    conv_spec = pl.BlockSpec((None, block_h, Wo, Cp), lambda n, i: (n, i, 0, 0))
    stat_spec = pl.BlockSpec((None, None, 1, Cp), lambda n, i: (n, i, 0, 0))

    kernel = _make_conv_stats_kernel(KH, KW, Cin, Wo, Cp, block_h)
    conv_out, part_sum, part_m2 = pl.pallas_call(
        kernel,
        out_shape=(
            jax.ShapeDtypeStruct((N, Ho, Wo, Cp), jnp.bfloat16),
            jax.ShapeDtypeStruct((N, n_hb, 1, Cp), jnp.float32),
            jax.ShapeDtypeStruct((N, n_hb, 1, Cp), jnp.float32),
        ),
        grid=grid,
        in_specs=[x_lo_spec] + halo_specs + [w_spec],
        out_specs=(conv_spec, stat_spec, stat_spec),
        scratch_shapes=[pltpu.VMEM((block_h + KH - 1, Wp, Cin), jnp.bfloat16)],
        compiler_params=compiler_params,
        cost_estimate=pl.CostEstimate(
            flops=int(2 * N * Ho * Wo * KH * KW * Cin * Cp),
            transcendentals=0,
            bytes_accessed=int(2 * N * Hp * Wp * Cin + 2 * KH * KW * Cin * Cp
                               + 2 * N * Ho * Wo * Cp + 8 * N * n_hb * Cp),
        ),
    )(x_pad, *([x_pad] * n_halo), w)

    # ---- global BN statistics: Chan/Welford combine of per-tile moments -----
    total = float(N * Ho * Wo)
    tile_cnt = float(block_h * Wo)
    tsum = part_sum[:, :, 0, :Cout]                       # (N, n_hb, Cout)
    tm2 = part_m2[:, :, 0, :Cout]
    mean = jnp.sum(tsum, axis=(0, 1)) / total             # (Cout,)
    tmean = tsum / tile_cnt
    m2 = jnp.sum(tm2, axis=(0, 1)) + tile_cnt * jnp.sum(
        jnp.square(tmean - mean.reshape(1, 1, -1)), axis=(0, 1))
    var = jnp.maximum(m2 / total, 0.0)                    # biased variance
    scale = gamma.astype(jnp.float32) * lax.rsqrt(var + eps)
    shift = beta.astype(jnp.float32) - mean * scale
    scale2d = scale.reshape(1, Cout)
    shift2d = shift.reshape(1, Cout)

    # ---- pass 2: normalize (streaming, mem-bound), write only Cout channels --
    y_nhwc = pl.pallas_call(
        _bn_apply_kernel,
        out_shape=jax.ShapeDtypeStruct((N, Ho, Wo, Cout), x_nchw.dtype),
        grid=grid,
        in_specs=[
            pl.BlockSpec((None, block_h, Wo, Cp), lambda n, i: (n, i, 0, 0)),
            pl.BlockSpec((1, Cout), lambda n, i: (0, 0)),
            pl.BlockSpec((1, Cout), lambda n, i: (0, 0)),
        ],
        out_specs=pl.BlockSpec((None, block_h, Wo, Cout),
                               lambda n, i: (n, i, 0, 0)),
        compiler_params=compiler_params,
        cost_estimate=pl.CostEstimate(
            flops=int(2 * N * Ho * Wo * Cout),
            transcendentals=0,
            bytes_accessed=int(2 * N * Ho * Wo * Cp + 4 * N * Ho * Wo * Cout),
        ),
    )(conv_out, scale2d, shift2d)

    # Back to the module's NCHW output layout.
    # TODO(synk): return NHWC directly when the consumer accepts it (saves one
    # output-sized HBM round trip).
    return jnp.transpose(y_nhwc, (0, 3, 1, 2))


def reference_conv_bn2d(x_nchw, weight_oihw, gamma, beta, *, padding=(1, 1),
                        eps=1e-5, operand_dtype=jnp.float32):
    """Pure-JAX reference matching PyTorch ConvBn2d.forward (training-mode BN)."""
    xq = x_nchw.astype(operand_dtype).astype(jnp.float32)
    wq = weight_oihw.astype(operand_dtype).astype(jnp.float32)
    conv = lax.conv_general_dilated(
        xq, wq, window_strides=(1, 1),
        padding=((padding[0], padding[0]), (padding[1], padding[1])),
        dimension_numbers=("NCHW", "OIHW", "NCHW"))
    mean = jnp.mean(conv, axis=(0, 2, 3), keepdims=True)
    var = jnp.mean((conv - mean) ** 2, axis=(0, 2, 3), keepdims=True)  # biased
    g = gamma.reshape(1, -1, 1, 1)
    b = beta.reshape(1, -1, 1, 1)
    return (conv - mean) * lax.rsqrt(var + eps) * g + b


if __name__ == "__main__":
    # Small shapes consistent with the module: ConvBn2d(in_channels=4, out_channels=8)
    N, Cin, H, W = 2, 4, 16, 16
    Cout, KH, KW = 8, 3, 3

    key = jax.random.PRNGKey(0)
    kx, kw_, kg, kb = jax.random.split(key, 4)

    x = jax.random.normal(kx, (N, Cin, H, W), dtype=jnp.float32)
    weight = jax.random.normal(kw_, (Cout, Cin, KH, KW), dtype=jnp.float32) * 0.1
    gamma = 1.0 + 0.1 * jax.random.normal(kg, (Cout,), dtype=jnp.float32)
    beta = 0.1 * jax.random.normal(kb, (Cout,), dtype=jnp.float32)

    # Reference with bf16-rounded operands (the kernel feeds the MXU bf16).
    ref = reference_conv_bn2d(x, weight, gamma, beta, operand_dtype=jnp.bfloat16)

    # Forced small row-block: exercises the cross-tile Welford stats combine.
    run_tiled = jax.jit(functools.partial(conv_bn2d, block_h=4))
    out = jax.block_until_ready(run_tiled(x, weight, gamma, beta))
    assert out.shape == (N, Cout, H, W), out.shape
    err = float(jnp.max(jnp.abs(out - ref)))
    assert jnp.allclose(out, ref, rtol=2e-2, atol=2e-2), err

    # Auto-sized tiling path (VMEM budget derived from the running chip).
    run_auto = jax.jit(conv_bn2d)
    out2 = jax.block_until_ready(run_auto(x, weight, gamma, beta))
    err2 = float(jnp.max(jnp.abs(out2 - ref)))
    assert jnp.allclose(out2, ref, rtol=2e-2, atol=2e-2), err2

    print("KERNEL_OK")
</pallas_src>

<mosaic_0001>
module attributes {stable_mosaic.version = 11 : i64} {
  func.func @kernel(%arg0: i32, %arg1: i32, %arg2: memref<1x4x18x4xbf16, #tpu.memory_space<vmem>>, %arg3: memref<1x1x18x4xbf16, #tpu.memory_space<vmem>>, %arg4: memref<1x1x18x4xbf16, #tpu.memory_space<vmem>>, %arg5: memref<9x4x128xbf16, #tpu.memory_space<vmem>>, %arg6: memref<1x4x16x128xbf16, #tpu.memory_space<vmem>>, %arg7: memref<1x1x1x128xf32, #tpu.memory_space<vmem>>, %arg8: memref<1x1x1x128xf32, #tpu.memory_space<vmem>>, %arg9: memref<6x18x4xbf16, #tpu.memory_space<vmem>>) attributes {dimension_semantics = [#tpu.dimension_semantics<parallel>, #tpu.dimension_semantics<parallel>], iteration_bounds = array<i64: 2, 4>, scalar_prefetch = 0 : i64, scratch_operands = 1 : i64, tpu.core_type = #tpu.core_type<tc>, window_params = [{transform_indices = @transform_0, window_bounds = array<i64: 1, 4, 18, 4>}, {transform_indices = @transform_1, window_bounds = array<i64: 1, 1, 18, 4>}, {transform_indices = @transform_2, window_bounds = array<i64: 1, 1, 18, 4>}, {pipeline_mode = #tpu.pipeline_mode<synchronous>, transform_indices = @transform_3, window_bounds = array<i64: 9, 4, 128>}, {transform_indices = @transform_4, window_bounds = array<i64: 1, 4, 16, 128>}, {transform_indices = @transform_5, window_bounds = array<i64: 1, 1, 1, 128>}, {transform_indices = @transform_6, window_bounds = array<i64: 1, 1, 1, 128>}]} {
    %c0 = arith.constant 0 : index
    %c0_0 = arith.constant 0 : index
    %c0_1 = arith.constant 0 : index
    %c0_2 = arith.constant 0 : index
    %0 = vector.load %arg2[%c0, %c0_0, %c0_1, %c0_2] : memref<1x4x18x4xbf16, #tpu.memory_space<vmem>>, vector<1x4x18x4xbf16>
    %1 = vector.shape_cast %0 : vector<1x4x18x4xbf16> to vector<4x18x4xbf16>
    %c0_3 = arith.constant 0 : index
    %c0_4 = arith.constant 0 : index
    %c0_5 = arith.constant 0 : index
    %2 = vector.load %arg9[%c0_3, %c0_4, %c0_5] : memref<6x18x4xbf16, #tpu.memory_space<vmem>>, vector<4x18x4xbf16>
    tpu.vector_store %arg9[%c0_3, %c0_4, %c0_5], %1 {strides = array<i32>} : memref<6x18x4xbf16, #tpu.memory_space<vmem>>, vector<4x18x4xbf16>,
    %c0_6 = arith.constant 0 : index
    %c0_7 = arith.constant 0 : index
    %c0_8 = arith.constant 0 : index
    %c0_9 = arith.constant 0 : index
    %3 = vector.load %arg3[%c0_6, %c0_7, %c0_8, %c0_9] : memref<1x1x18x4xbf16, #tpu.memory_space<vmem>>, vector<1x1x18x4xbf16>
    %4 = vector.shape_cast %3 : vector<1x1x18x4xbf16> to vector<18x4xbf16>
    %c4 = arith.constant 4 : index
    %c0_10 = arith.constant 0 : index
    %c0_11 = arith.constant 0 : index
    %5 = vector.load %arg9[%c4, %c0_10, %c0_11] : memref<6x18x4xbf16, #tpu.memory_space<vmem>>, vector<1x18x4xbf16>
    %6 = vector.shape_cast %5 : vector<1x18x4xbf16> to vector<18x4xbf16>
    %7 = vector.shape_cast %4 : vector<18x4xbf16> to vector<1x18x4xbf16>
    tpu.vector_store %arg9[%c4, %c0_10, %c0_11], %7 {strides = array<i32>} : memref<6x18x4xbf16, #tpu.memory_space<vmem>>, vector<1x18x4xbf16>,
    %c0_12 = arith.constant 0 : index
    %c0_13 = arith.constant 0 : index
    %c0_14 = arith.constant 0 : index
    %c0_15 = arith.constant 0 : index
    %8 = vector.load %arg4[%c0_12, %c0_13, %c0_14, %c0_15] : memref<1x1x18x4xbf16, #tpu.memory_space<vmem>>, vector<1x1x18x4xbf16>
    %9 = vector.shape_cast %8 : vector<1x1x18x4xbf16> to vector<18x4xbf16>
    %c5 = arith.constant 5 : index
    %c0_16 = arith.constant 0 : index
    %c0_17 = arith.constant 0 : index
    %10 = vector.load %arg9[%c5, %c0_16, %c0_17] : memref<6x18x4xbf16, #tpu.memory_space<vmem>>, vector<1x18x4xbf16>
    %11 = vector.shape_cast %10 : vector<1x18x4xbf16> to vector<18x4xbf16>
    %12 = vector.shape_cast %9 : vector<18x4xbf16> to vector<1x18x4xbf16>
    tpu.vector_store %arg9[%c5, %c0_16, %c0_17], %12 {strides = array<i32>} : memref<6x18x4xbf16, #tpu.memory_space<vmem>>, vector<1x18x4xbf16>,
    %cst = arith.constant 0.000000e+00 : f32
    %13 = vector.broadcast %cst : f32 to vector<64x128xf32>
    %c0_18 = arith.constant 0 : index
    %c0_19 = arith.constant 0 : index
    %c0_20 = arith.constant 0 : index
    %14 = vector.load %arg9[%c0_18, %c0_19, %c0_20] : memref<6x18x4xbf16, #tpu.memory_space<vmem>>, vector<4x16x4xbf16>
    %15 = vector.shape_cast %14 : vector<4x16x4xbf16> to vector<64x4xbf16>
    %c0_21 = arith.constant 0 : index
    %c0_22 = arith.constant 0 : index
    %c0_23 = arith.constant 0 : index
    %16 = vector.load %arg5[%c0_21, %c0_22, %c0_23] : memref<9x4x128xbf16, #tpu.memory_space<vmem>>, vector<1x4x128xbf16>
    %17 = vector.shape_cast %16 : vector<1x4x128xbf16> to vector<4x128xbf16>
    %cst_24 = arith.constant dense<0.000000e+00> : vector<64x128xf32>
    %18 = tpu.matmul %15, %17, %cst_24 {dimension_numbers = #tpu.dot_dimension_numbers<[1], [0], [0], [1], [0, 0, 1, 1], [], []>} : vector<64x4xbf16>, vector<4x128xbf16>, vector<64x128xf32> -> vector<64x128xf32>
    %19 = arith.addf %13, %18 : vector<64x128xf32>
    %c0_25 = arith.constant 0 : index
    %c1 = arith.constant 1 : index
    %c0_26 = arith.constant 0 : index
    %20 = vector.load %arg9[%c0_25, %c1, %c0_26] : memref<6x18x4xbf16, #tpu.memory_space<vmem>>, vector<4x16x4xbf16>
    %21 = vector.shape_cast %20 : vector<4x16x4xbf16> to vector<64x4xbf16>
    %c1_27 = arith.constant 1 : index
    %c0_28 = arith.constant 0 : index
    %c0_29 = arith.constant 0 : index
    %22 = vector.load %arg5[%c1_27, %c0_28, %c0_29] : memref<9x4x128xbf16, #tpu.memory_space<vmem>>, vector<1x4x128xbf16>
    %23 = vector.shape_cast %22 : vector<1x4x128xbf16> to vector<4x128xbf16>
    %cst_30 = arith.constant dense<0.000000e+00> : vector<64x128xf32>
    %24 = tpu.matmul %21, %23, %cst_30 {dimension_numbers = #tpu.dot_dimension_numbers<[1], [0], [0], [1], [0, 0, 1, 1], [], []>} : vector<64x4xbf16>, vector<4x128xbf16>, vector<64x128xf32> -> vector<64x128xf32>
    %25 = arith.addf %19, %24 : vector<64x128xf32>
    %c0_31 = arith.constant 0 : index
    %c2 = arith.constant 2 : index
    %c0_32 = arith.constant 0 : index
    %26 = vector.load %arg9[%c0_31, %c2, %c0_32] : memref<6x18x4xbf16, #tpu.memory_space<vmem>>, vector<4x16x4xbf16>
    %27 = vector.shape_cast %26 : vector<4x16x4xbf16> to vector<64x4xbf16>
    %c2_33 = arith.constant 2 : index
    %c0_34 = arith.constant 0 : index
    %c0_35 = arith.constant 0 : index
    %28 = vector.load %arg5[%c2_33, %c0_34, %c0_35] : memref<9x4x128xbf16, #tpu.memory_space<vmem>>, vector<1x4x128xbf16>
    %29 = vector.shape_cast %28 : vector<1x4x128xbf16> to vector<4x128xbf16>
    %cst_36 = arith.constant dense<0.000000e+00> : vector<64x128xf32>
    %30 = tpu.matmul %27, %29, %cst_36 {dimension_numbers = #tpu.dot_dimension_numbers<[1], [0], [0], [1], [0, 0, 1, 1], [], []>} : vector<64x4xbf16>, vector<4x128xbf16>, vector<64x128xf32> -> vector<64x128xf32>
    %31 = arith.addf %25, %30 : vector<64x128xf32>
    %c1_37 = arith.constant 1 : index
    %c0_38 = arith.constant 0 : index
    %c0_39 = arith.constant 0 : index
    %32 = vector.load %arg9[%c1_37, %c0_38, %c0_39] : memref<6x18x4xbf16, #tpu.memory_space<vmem>>, vector<4x16x4xbf16>
    %33 = vector.shape_cast %32 : vector<4x16x4xbf16> to vector<64x4xbf16>
    %c3 = arith.constant 3 : index
    %c0_40 = arith.constant 0 : index
    %c0_41 = arith.constant 0 : index
    %34 = vector.load %arg5[%c3, %c0_40, %c0_41] : memref<9x4x128xbf16, #tpu.memory_space<vmem>>, vector<1x4x128xbf16>
    %35 = vector.shape_cast %34 : vector<1x4x128xbf16> to vector<4x128xbf16>
    %cst_42 = arith.constant dense<0.000000e+00> : vector<64x128xf32>
    %36 = tpu.matmul %33, %35, %cst_42 {dimension_numbers = #tpu.dot_dimension_numbers<[1], [0], [0], [1], [0, 0, 1, 1], [], []>} : vector<64x4xbf16>, vector<4x128xbf16>, vector<64x128xf32> -> vector<64x128xf32>
    %37 = arith.addf %31, %36 : vector<64x128xf32>
    %c1_43 = arith.constant 1 : index
    %c1_44 = arith.constant 1 : index
    %c0_45 = arith.constant 0 : index
    %38 = vector.load %arg9[%c1_43, %c1_44, %c0_45] : memref<6x18x4xbf16, #tpu.memory_space<vmem>>, vector<4x16x4xbf16>
    %39 = vector.shape_cast %38 : vector<4x16x4xbf16> to vector<64x4xbf16>
    %c4_46 = arith.constant 4 : index
    %c0_47 = arith.constant 0 : index
    %c0_48 = arith.constant 0 : index
    %40 = vector.load %arg5[%c4_46, %c0_47, %c0_48] : memref<9x4x128xbf16, #tpu.memory_space<vmem>>, vector<1x4x128xbf16>
    %41 = vector.shape_cast %40 : vector<1x4x128xbf16> to vector<4x128xbf16>
    %cst_49 = arith.constant dense<0.000000e+00> : vector<64x128xf32>
    %42 = tpu.matmul %39, %41, %cst_49 {dimension_numbers = #tpu.dot_dimension_numbers<[1], [0], [0], [1], [0, 0, 1, 1], [], []>} : vector<64x4xbf16>, vector<4x128xbf16>, vector<64x128xf32> -> vector<64x128xf32>
    %43 = arith.addf %37, %42 : vector<64x128xf32>
    %c1_50 = arith.constant 1 : index
    %c2_51 = arith.constant 2 : index
    %c0_52 = arith.constant 0 : index
    %44 = vector.load %arg9[%c1_50, %c2_51, %c0_52] : memref<6x18x4xbf16, #tpu.memory_space<vmem>>, vector<4x16x4xbf16>
    %45 = vector.shape_cast %44 : vector<4x16x4xbf16> to vector<64x4xbf16>
    %c5_53 = arith.constant 5 : index
    %c0_54 = arith.constant 0 : index
    %c0_55 = arith.constant 0 : index
    %46 = vector.load %arg5[%c5_53, %c0_54, %c0_55] : memref<9x4x128xbf16, #tpu.memory_space<vmem>>, vector<1x4x128xbf16>
    %47 = vector.shape_cast %46 : vector<1x4x128xbf16> to vector<4x128xbf16>
    %cst_56 = arith.constant dense<0.000000e+00> : vector<64x128xf32>
    %48 = tpu.matmul %45, %47, %cst_56 {dimension_numbers = #tpu.dot_dimension_numbers<[1], [0], [0], [1], [0, 0, 1, 1], [], []>} : vector<64x4xbf16>, vector<4x128xbf16>, vector<64x128xf32> -> vector<64x128xf32>
    %49 = arith.addf %43, %48 : vector<64x128xf32>
    %c2_57 = arith.constant 2 : index
    %c0_58 = arith.constant 0 : index
    %c0_59 = arith.constant 0 : index
    %50 = vector.load %arg9[%c2_57, %c0_58, %c0_59] : memref<6x18x4xbf16, #tpu.memory_space<vmem>>, vector<4x16x4xbf16>
    %51 = vector.shape_cast %50 : vector<4x16x4xbf16> to vector<64x4xbf16>
    %c6 = arith.constant 6 : index
    %c0_60 = arith.constant 0 : index
    %c0_61 = arith.constant 0 : index
    %52 = vector.load %arg5[%c6, %c0_60, %c0_61] : memref<9x4x128xbf16, #tpu.memory_space<vmem>>, vector<1x4x128xbf16>
    %53 = vector.shape_cast %52 : vector<1x4x128xbf16> to vector<4x128xbf16>
    %cst_62 = arith.constant dense<0.000000e+00> : vector<64x128xf32>
    %54 = tpu.matmul %51, %53, %cst_62 {dimension_numbers = #tpu.dot_dimension_numbers<[1], [0], [0], [1], [0, 0, 1, 1], [], []>} : vector<64x4xbf16>, vector<4x128xbf16>, vector<64x128xf32> -> vector<64x128xf32>
    %55 = arith.addf %49, %54 : vector<64x128xf32>
    %c2_63 = arith.constant 2 : index
    %c1_64 = arith.constant 1 : index
    %c0_65 = arith.constant 0 : index
    %56 = vector.load %arg9[%c2_63, %c1_64, %c0_65] : memref<6x18x4xbf16, #tpu.memory_space<vmem>>, vector<4x16x4xbf16>
    %57 = vector.shape_cast %56 : vector<4x16x4xbf16> to vector<64x4xbf16>
    %c7 = arith.constant 7 : index
    %c0_66 = arith.constant 0 : index
    %c0_67 = arith.constant 0 : index
    %58 = vector.load %arg5[%c7, %c0_66, %c0_67] : memref<9x4x128xbf16, #tpu.memory_space<vmem>>, vector<1x4x128xbf16>
    %59 = vector.shape_cast %58 : vector<1x4x128xbf16> to vector<4x128xbf16>
    %cst_68 = arith.constant dense<0.000000e+00> : vector<64x128xf32>
    %60 = tpu.matmul %57, %59, %cst_68 {dimension_numbers = #tpu.dot_dimension_numbers<[1], [0], [0], [1], [0, 0, 1, 1], [], []>} : vector<64x4xbf16>, vector<4x128xbf16>, vector<64x128xf32> -> vector<64x128xf32>
    %61 = arith.addf %55, %60 : vector<64x128xf32>
    %c2_69 = arith.constant 2 : index
    %c2_70 = arith.constant 2 : index
    %c0_71 = arith.constant 0 : index
    %62 = vector.load %arg9[%c2_69, %c2_70, %c0_71] : memref<6x18x4xbf16, #tpu.memory_space<vmem>>, vector<4x16x4xbf16>
    %63 = vector.shape_cast %62 : vector<4x16x4xbf16> to vector<64x4xbf16>
    %c8 = arith.constant 8 : index
    %c0_72 = arith.constant 0 : index
    %c0_73 = arith.constant 0 : index
    %64 = vector.load %arg5[%c8, %c0_72, %c0_73] : memref<9x4x128xbf16, #tpu.memory_space<vmem>>, vector<1x4x128xbf16>
    %65 = vector.shape_cast %64 : vector<1x4x128xbf16> to vector<4x128xbf16>
    %cst_74 = arith.constant dense<0.000000e+00> : vector<64x128xf32>
    %66 = tpu.matmul %63, %65, %cst_74 {dimension_numbers = #tpu.dot_dimension_numbers<[1], [0], [0], [1], [0, 0, 1, 1], [], []>} : vector<64x4xbf16>, vector<4x128xbf16>, vector<64x128xf32> -> vector<64x128xf32>
    %67 = arith.addf %61, %66 : vector<64x128xf32>
    %68 = vector.shape_cast %67 : vector<64x128xf32> to vector<4x16x128xf32>
    %69 = arith.truncf %68 : vector<4x16x128xf32> to vector<4x16x128xbf16>
    %c0_75 = arith.constant 0 : index
    %c0_76 = arith.constant 0 : index
    %c0_77 = arith.constant 0 : index
    %c0_78 = arith.constant 0 : index
    %70 = vector.load %arg6[%c0_75, %c0_76, %c0_77, %c0_78] : memref<1x4x16x128xbf16, #tpu.memory_space<vmem>>, vector<1x4x16x128xbf16>
    %71 = vector.shape_cast %70 : vector<1x4x16x128xbf16> to vector<4x16x128xbf16>
    %72 = vector.shape_cast %69 : vector<4x16x128xbf16> to vector<1x4x16x128xbf16>
    tpu.vector_store %arg6[%c0_75, %c0_76, %c0_77, %c0_78], %72 {strides = array<i32>} : memref<1x4x16x128xbf16, #tpu.memory_space<vmem>>, vector<1x4x16x128xbf16>,
    %cst_79 = arith.constant dense<0.000000e+00> : vector<128xf32>
    %73 = vector.multi_reduction <add>, %67, %cst_79 [0] : vector<64x128xf32> to vector<128xf32>
    %74 = vector.shape_cast %73 : vector<128xf32> to vector<1x128xf32>
    %cst_80 = arith.constant 1.562500e-02 : f32
    %75 = vector.broadcast %cst_80 : f32 to vector<1x128xf32>
    %76 = arith.mulf %74, %75 : vector<1x128xf32>
    %77 = vector.broadcast %76 : vector<1x128xf32> to vector<64x128xf32>
    %78 = arith.subf %67, %77 : vector<64x128xf32>
    %c0_81 = arith.constant 0 : index
    %c0_82 = arith.constant 0 : index
    %c0_83 = arith.constant 0 : index
    %c0_84 = arith.constant 0 : index
    %79 = vector.load %arg7[%c0_81, %c0_82, %c0_83, %c0_84] : memref<1x1x1x128xf32, #tpu.memory_space<vmem>>, vector<1x1x1x128xf32>
    %80 = vector.shape_cast %79 : vector<1x1x1x128xf32> to vector<1x128xf32>
    %81 = vector.shape_cast %74 : vector<1x128xf32> to vector<1x1x1x128xf32>
    tpu.vector_store %arg7[%c0_81, %c0_82, %c0_83, %c0_84], %81 {strides = array<i32>} : memref<1x1x1x128xf32, #tpu.memory_space<vmem>>, vector<1x1x1x128xf32>,
    %82 = arith.mulf %78, %78 : vector<64x128xf32>
    %cst_85 = arith.constant dense<0.000000e+00> : vector<128xf32>
    %83 = vector.multi_reduction <add>, %82, %cst_85 [0] : vector<64x128xf32> to vector<128xf32>
    %84 = vector.shape_cast %83 : vector<128xf32> to vector<1x128xf32>
    %c0_86 = arith.constant 0 : index
    %c0_87 = arith.constant 0 : index
    %c0_88 = arith.constant 0 : index
    %c0_89 = arith.constant 0 : index
    %85 = vector.load %arg8[%c0_86, %c0_87, %c0_88, %c0_89] : memref<1x1x1x128xf32, #tpu.memory_space<vmem>>, vector<1x1x1x128xf32>
    %86 = vector.shape_cast %85 : vector<1x1x1x128xf32> to vector<1x128xf32>
    %87 = vector.shape_cast %84 : vector<1x128xf32> to vector<1x1x1x128xf32>
    tpu.vector_store %arg8[%c0_86, %c0_87, %c0_88, %c0_89], %87 {strides = array<i32>} : memref<1x1x1x128xf32, #tpu.memory_space<vmem>>, vector<1x1x1x128xf32>,
    return
  }
  func.func @transform_0(%arg0: i32, %arg1: i32) -> (i32, i32, i32, i32) {
    %c0_i32 = arith.constant 0 : i32
    %c0_i32_0 = arith.constant 0 : i32
    %c0_i32_1 = arith.constant 0 : i32
    return %arg0, %arg1, %c0_i32, %c0_i32_0 : i32, i32, i32, i32
  }
  func.func @transform_1(%arg0: i32, %arg1: i32) -> (i32, i32, i32, i32) {
    %c1_i32 = arith.constant 1 : i32
    %0 = arith.addi %arg1, %c1_i32 : i32
    %c4_i32 = arith.constant 4 : i32
    %1 = arith.muli %0, %c4_i32 : i32
    %c0_i32 = arith.constant 0 : i32
    %2 = arith.addi %1, %c0_i32 : i32
    %c0_i32_0 = arith.constant 0 : i32
    %c0_i32_1 = arith.constant 0 : i32
    %c0_i32_2 = arith.constant 0 : i32
    return %arg0, %2, %c0_i32_0, %c0_i32_1 : i32, i32, i32, i32
  }
  func.func @transform_2(%arg0: i32, %arg1: i32) -> (i32, i32, i32, i32) {
    %c1_i32 = arith.constant 1 : i32
    %0 = arith.addi %arg1, %c1_i32 : i32
    %c4_i32 = arith.constant 4 : i32
    %1 = arith.muli %0, %c4_i32 : i32
    %c1_i32_0 = arith.constant 1 : i32
    %2 = arith.addi %1, %c1_i32_0 : i32
    %c0_i32 = arith.constant 0 : i32
    %c0_i32_1 = arith.constant 0 : i32
    %c0_i32_2 = arith.constant 0 : i32
    return %arg0, %2, %c0_i32, %c0_i32_1 : i32, i32, i32, i32
  }
  func.func @transform_3(%arg0: i32, %arg1: i32) -> (i32, i32, i32) {
    %c0_i32 = arith.constant 0 : i32
    %c0_i32_0 = arith.constant 0 : i32
    %c0_i32_1 = arith.constant 0 : i32
    %c0_i32_2 = arith.constant 0 : i32
    return %c0_i32, %c0_i32_0, %c0_i32_1 : i32, i32, i32
  }
  func.func @transform_4(%arg0: i32, %arg1: i32) -> (i32, i32, i32, i32) {
    %c0_i32 = arith.constant 0 : i32
    %c0_i32_0 = arith.constant 0 : i32
    %c0_i32_1 = arith.constant 0 : i32
    return %arg0, %arg1, %c0_i32, %c0_i32_0 : i32, i32, i32, i32
  }
  func.func @transform_5(%arg0: i32, %arg1: i32) -> (i32, i32, i32, i32) {
    %c0_i32 = arith.constant 0 : i32
    %c0_i32_0 = arith.constant 0 : i32
    %c0_i32_1 = arith.constant 0 : i32
    return %arg0, %arg1, %c0_i32, %c0_i32_0 : i32, i32, i32, i32
  }
  func.func @transform_6(%arg0: i32, %arg1: i32) -> (i32, i32, i32, i32) {
    %c0_i32 = arith.constant 0 : i32
    %c0_i32_0 = arith.constant 0 : i32
    %c0_i32_1 = arith.constant 0 : i32
    return %arg0, %arg1, %c0_i32, %c0_i32_0 : i32, i32, i32, i32
  }
}

module attributes {stable_mosaic.version = 11 : i64} {
  func.func @_bn_apply_kernel(%arg0: i32, %arg1: i32, %arg2: memref<1x4x16x128xbf16, #tpu.memory_space<vmem>>, %arg3: memref<1x8xf32, #tpu.memory_space<vmem>>, %arg4: memref<1x8xf32, #tpu.memory_space<vmem>>, %arg5: memref<1x4x16x8xf32, #tpu.memory_space<vmem>>) attributes {dimension_semantics = [#tpu.dimension_semantics<parallel>, #tpu.dimension_semantics<parallel>], iteration_bounds = array<i64: 2, 4>, scalar_prefetch = 0 : i64, scratch_operands = 0 : i64, tpu.core_type = #tpu.core_type<tc>, window_params = [{transform_indices = @transform_0, window_bounds = array<i64: 1, 4, 16, 128>}, {pipeline_mode = #tpu.pipeline_mode<synchronous>, transform_indices = @transform_1, window_bounds = array<i64: 1, 8>}, {pipeline_mode = #tpu.pipeline_mode<synchronous>, transform_indices = @transform_2, window_bounds = array<i64: 1, 8>}, {transform_indices = @transform_3, window_bounds = array<i64: 1, 4, 16, 8>}]} {
    %c0 = arith.constant 0 : index
    %c0_0 = arith.constant 0 : index
    %c0_1 = arith.constant 0 : index
    %c0_2 = arith.constant 0 : index
    %0 = vector.load %arg2[%c0, %c0_0, %c0_1, %c0_2] : memref<1x4x16x128xbf16, #tpu.memory_space<vmem>>, vector<1x4x16x8xbf16>
    %1 = vector.shape_cast %0 : vector<1x4x16x8xbf16> to vector<4x16x8xbf16>
    %2 = arith.extf %1 : vector<4x16x8xbf16> to vector<4x16x8xf32>
    %c0_3 = arith.constant 0 : index
    %c0_4 = arith.constant 0 : index
    %3 = vector.load %arg3[%c0_3, %c0_4] : memref<1x8xf32, #tpu.memory_space<vmem>>, vector<1x8xf32>
    %4 = vector.shape_cast %3 : vector<1x8xf32> to vector<1x1x8xf32>
    %c0_5 = arith.constant 0 : index
    %c0_6 = arith.constant 0 : index
    %5 = vector.load %arg4[%c0_5, %c0_6] : memref<1x8xf32, #tpu.memory_space<vmem>>, vector<1x8xf32>
    %6 = vector.shape_cast %5 : vector<1x8xf32> to vector<1x1x8xf32>
    %7 = vector.broadcast %4 : vector<1x1x8xf32> to vector<4x16x8xf32>
    %8 = arith.mulf %2, %7 : vector<4x16x8xf32>
    %9 = vector.broadcast %6 : vector<1x1x8xf32> to vector<4x16x8xf32>
    %10 = arith.addf %8, %9 : vector<4x16x8xf32>
    %c0_7 = arith.constant 0 : index
    %c0_8 = arith.constant 0 : index
    %c0_9 = arith.constant 0 : index
    %c0_10 = arith.constant 0 : index
    %11 = vector.load %arg5[%c0_7, %c0_8, %c0_9, %c0_10] : memref<1x4x16x8xf32, #tpu.memory_space<vmem>>, vector<1x4x16x8xf32>
    %12 = vector.shape_cast %11 : vector<1x4x16x8xf32> to vector<4x16x8xf32>
    %13 = vector.shape_cast %10 : vector<4x16x8xf32> to vector<1x4x16x8xf32>
    tpu.vector_store %arg5[%c0_7, %c0_8, %c0_9, %c0_10], %13 {strides = array<i32>} : memref<1x4x16x8xf32, #tpu.memory_space<vmem>>, vector<1x4x16x8xf32>,
    return
  }
  func.func @transform_0(%arg0: i32, %arg1: i32) -> (i32, i32, i32, i32) {
    %c0_i32 = arith.constant 0 : i32
    %c0_i32_0 = arith.constant 0 : i32
    %c0_i32_1 = arith.constant 0 : i32
    return %arg0, %arg1, %c0_i32, %c0_i32_0 : i32, i32, i32, i32
  }
  func.func @transform_1(%arg0: i32, %arg1: i32) -> (i32, i32) {
    %c0_i32 = arith.constant 0 : i32
    %c0_i32_0 = arith.constant 0 : i32
    %c0_i32_1 = arith.constant 0 : i32
    return %c0_i32, %c0_i32_0 : i32, i32
  }
  func.func @transform_2(%arg0: i32, %arg1: i32) -> (i32, i32) {
    %c0_i32 = arith.constant 0 : i32
    %c0_i32_0 = arith.constant 0 : i32
    %c0_i32_1 = arith.constant 0 : i32
    return %c0_i32, %c0_i32_0 : i32, i32
  }
  func.func @transform_3(%arg0: i32, %arg1: i32) -> (i32, i32, i32, i32) {
    %c0_i32 = arith.constant 0 : i32
    %c0_i32_0 = arith.constant 0 : i32
    %c0_i32_1 = arith.constant 0 : i32
    return %arg0, %arg1, %c0_i32, %c0_i32_0 : i32, i32, i32, i32
  }
}

</mosaic_0001>

<llo_original>
// kernel: conv_bn2d.3
$region0: #{conv_bn2d.3}
  #allocation0 [shape = 'u32[]', space=smem, size = 0x4, offset = 0x4, fixed_abs, tag = 'smem constant byte address 0x4 - core index']
  #allocation1 [shape = 'u32[72,128]{1,0:T(1,128)}', space=vmem, size = 0x9000, scoped, tag = 'internal scratch']
  %s0 = inlined_call_operand.vmem [shape: bf16[2,16,16,128], index: 0, kind: input, shape index: {}]
  %s1 = inlined_call_operand.vmem [shape: f32[1,8], index: 1, kind: input, shape index: {}]
  %s2 = inlined_call_operand.vmem [shape: f32[1,8], index: 2, kind: input, shape index: {}]
  %s3 = inlined_call_operand.vmem [shape: f32[2,16,16,8], index: 3, kind: output, shape index: {}]
  %s4 = sld [smem:[#allocation0]]
  $region45: #{conv_bn2d.3} parent=0
    _
  %s6 = ssub.s32 1, %s4
  %s7 = scalar_select 0, %s6, %s4
  loop: start=0, step=1, limit=10
  $region2: #{conv_bn2d.3} parent=0 // loop_pre_header
    _
  $region3: #{conv_bn2d.3} parent=0 // loop_header
    %s9 = sphi 0, %s13
    %p10 = scmp.ge.s32.totalorder %s9, 10
    %s16 = sphi 0, %s28
    %s17 = sphi 0, %s24
    %s18 = sphi 0, %s16
    %s19 = sphi 0, %s17
    %s20 = sphi 0, %s18
    %s21 = sphi 0, %s19
    %s33 = sphi 0, %s35
    %s36 = sphi 0, %s33
    %s37 = sphi 0, %s36
    %s53 = sphi 0, %s37
    %s57 = sphi 0, %s57
    %s59 = sphi 0, %s57
    %s60 = sphi 0, %s59
    %s74 = sphi 0, %s60
    %s78 = sphi 0, %s78
    %s80 = sphi 0, %s78
    %s81 = sphi 0, %s80
    %s95 = sphi 0, %s81
    %s103 = sphi 0, %s105
    %s106 = sphi 0, %s103
    %s107 = sphi 0, %s106
    %s123 = sphi 0, %s107
  $region4: #{conv_bn2d.3} parent=0 // loop_header_branch
    %12 = sbr.rel (%p10) target = $region8
  $region5: #{conv_bn2d.3} parent=0 // loop_body
    %s14 = ssub.s32 %s9, 1
    %s15 = ssub.s32 %s9, 2
    %s22 = sadd.s32 1, %s17
    %p23 = scmp.ge.s32.totalorder %s22, 4
    %s24 = scalar_select %p23, 0, %s22
    %s25 = sadd.s32 1, %s16
    %s26 = scalar_select %p23, %s25, %s16
    %p27 = scmp.ge.s32.totalorder %s26, 2
    %s28 = scalar_select %p27, 0, %s26
    %s29 = ssub.s32 %s16, %s28
    %s30 = ssub.s32 %s17, %s24
    %s31 = sor.u32 %s29, %s30
    %p32 = scmp.eq.s32.totalorder %s31, 0
    %s34 = sadd.s32 %s33, 1
    %s35 = scalar_select %p32, %s33, %s34
    %p38 = pneg %p32
    %p39 = scmp.eq.s32.totalorder %s9, 7
    %p40 = por %p38, %p39
    %p41 = scmp.ne.s32.totalorder %s33, %s36
    %p42 = scmp.eq.s32.totalorder %s9, 0
    %p43 = por %p41, %p42
    %p44 = scmp.ne.s32.totalorder %s33, %s36
    %p45 = scmp.eq.s32.totalorder %s14, 7
    %p46 = por %p44, %p45
    %p47 = scmp.ne.s32.totalorder %s36, %s37
    %p48 = scmp.eq.s32.totalorder %s14, 0
    %p49 = por %p47, %p48
    %p50 = scmp.ne.s32.totalorder %s36, %s37
    %p51 = scmp.eq.s32.totalorder %s15, 7
    %p52 = por %p50, %p51
    %p54 = scmp.ne.s32.totalorder %s37, %s53
    %p55 = scmp.eq.s32.totalorder %s15, 0
    %p56 = por %p54, %p55
    %s58 = sadd.s32 %s57, 1
    %p61 = scmp.eq.s32.totalorder %s9, 7
    %p62 = scmp.ne.s32.totalorder %s57, %s59
    %p63 = scmp.eq.s32.totalorder %s9, 0
    %p64 = por %p62, %p63
    %p65 = scmp.ne.s32.totalorder %s57, %s59
    %p66 = scmp.eq.s32.totalorder %s14, 7
    %p67 = por %p65, %p66
    %p68 = scmp.ne.s32.totalorder %s59, %s60
    %p69 = scmp.eq.s32.totalorder %s14, 0
    %p70 = por %p68, %p69
    %p71 = scmp.ne.s32.totalorder %s59, %s60
    %p72 = scmp.eq.s32.totalorder %s15, 7
    %p73 = por %p71, %p72
    %p75 = scmp.ne.s32.totalorder %s60, %s74
    %p76 = scmp.eq.s32.totalorder %s15, 0
    %p77 = por %p75, %p76
    %s79 = sadd.s32 %s78, 1
    %p82 = scmp.eq.s32.totalorder %s9, 7
    %p83 = scmp.ne.s32.totalorder %s78, %s80
    %p84 = scmp.eq.s32.totalorder %s9, 0
    %p85 = por %p83, %p84
    %p86 = scmp.ne.s32.totalorder %s78, %s80
    %p87 = scmp.eq.s32.totalorder %s14, 7
    %p88 = por %p86, %p87
    %p89 = scmp.ne.s32.totalorder %s80, %s81
    %p90 = scmp.eq.s32.totalorder %s14, 0
    %p91 = por %p89, %p90
    %p92 = scmp.ne.s32.totalorder %s80, %s81
    %p93 = scmp.eq.s32.totalorder %s15, 7
    %p94 = por %p92, %p93
    %p96 = scmp.ne.s32.totalorder %s81, %s95
    %p97 = scmp.eq.s32.totalorder %s15, 0
    %p98 = por %p96, %p97
    %s99 = ssub.s32 %s16, %s28
    %s100 = ssub.s32 %s17, %s24
    %s101 = sor.u32 %s99, %s100
    %p102 = scmp.eq.s32.totalorder %s101, 0
    %s104 = sadd.s32 %s103, 1
    %s105 = scalar_select %p102, %s103, %s104
    %p108 = pneg %p102
    %p109 = scmp.eq.s32.totalorder %s9, 7
    %p110 = por %p108, %p109
    %p111 = scmp.ne.s32.totalorder %s103, %s106
    %p112 = scmp.eq.s32.totalorder %s9, 0
    %p113 = por %p111, %p112
    %p114 = scmp.ne.s32.totalorder %s103, %s106
    %p115 = scmp.eq.s32.totalorder %s14, 7
    %p116 = por %p114, %p115
    %p117 = scmp.ne.s32.totalorder %s106, %s107
    %p118 = scmp.eq.s32.totalorder %s14, 0
    %p119 = por %p117, %p118
    %p120 = scmp.ne.s32.totalorder %s106, %s107
    %p121 = scmp.eq.s32.totalorder %s15, 7
    %p122 = por %p120, %p121
    %p124 = scmp.ne.s32.totalorder %s107, %s123
    %p125 = scmp.eq.s32.totalorder %s15, 0
    %p126 = por %p124, %p125
    %p127 = scmp.le.s32.totalorder 1, %s9
    %p128 = scmp.lt.s32.totalorder %s9, 9
    %p129 = pnand %p127, %p128
    %p130 = pneg %p129
    // Predicated region
    $region9: #{conv_bn2d.3} parent=5 // pred_check
      _
    $region10: #{conv_bn2d.3} parent=5 // pred_check_branch
      %132 = sbr.rel (%p129) target = $region12
    $region11: #{conv_bn2d.3} parent=5 // pred_region
      %s133 = ssub.s32 %s9, 1
      // Predicated region
      $region13: #{conv_bn2d.3} parent=11 // pred_check
        %p134 = pneg %p70
      $region14: #{conv_bn2d.3} parent=11 // pred_check_branch
        %136 = sbr.rel (%p134) target = $region16
      $region15: #{conv_bn2d.3} parent=11 // pred_region
        _
      $region16: #{conv_bn2d.3} parent=11 // pred_fallthru
        _
      // Predicated region
      $region17: #{conv_bn2d.3} parent=11 // pred_check
        %p137 = pneg %p91
      $region18: #{conv_bn2d.3} parent=11 // pred_check_branch
        %139 = sbr.rel (%p137) target = $region20
      $region19: #{conv_bn2d.3} parent=11 // pred_region
        _
      $region20: #{conv_bn2d.3} parent=11 // pred_fallthru
        _
    $region12: #{conv_bn2d.3} parent=5 // pred_fallthru
      _
    %p140 = scmp.lt.s32.totalorder %s9, 8
    // Predicated region
    $region21: #{conv_bn2d.3} parent=5 // pred_check
      %p141 = pneg %p140
    $region22: #{conv_bn2d.3} parent=5 // pred_check_branch
      %143 = sbr.rel (%p141) target = $region24
    $region23: #{conv_bn2d.3} parent=5 // pred_region
      // Predicated region
      $region25: #{conv_bn2d.3} parent=23 // pred_check
        %p144 = pneg %p43
      $region26: #{conv_bn2d.3} parent=23 // pred_check_branch
        %146 = sbr.rel (%p144) target = $region28
      $region27: #{conv_bn2d.3} parent=23 // pred_region
        %s147 = smul.u32 4, %s17
        %p148 = scmp.lt.s32.totalorder %s16, 1
        %s149 = scalar_select %p148, %s16, 1
        %p150 = scmp.lt.s32.totalorder %s147, 15
        %s151 = scalar_select %p150, %s147, 15
        %s152 = smul.addr %s151, 2
        %s153 = smul.addr %s149, 32
        %s154 = sadd.s32 %s152, %s153
        %s155 = smul.addr %s154, 4
        %s156 = scalar_lea.vmem %s0, %s155
        %s157 = smul.u32 4, %s17
      $region28: #{conv_bn2d.3} parent=23 // pred_fallthru
        _
    $region24: #{conv_bn2d.3} parent=5 // pred_fallthru
      _
    %p158 = scmp.le.s32.totalorder 1, %s9
    %p159 = scmp.lt.s32.totalorder %s9, 9
    %p160 = pnand %p158, %p159
    %p161 = pneg %p160
    // Predicated region
    $region29: #{conv_bn2d.3} parent=5 // pred_check
      _
    $region30: #{conv_bn2d.3} parent=5 // pred_check_branch
      %163 = sbr.rel (%p160) target = $region32
    $region31: #{conv_bn2d.3} parent=5 // pred_region
      %s164 = ssub.s32 %s9, 1
      %s165 = smul.u32 4, %s19
      %p166 = scmp.lt.s32.totalorder %s18, 1
      %s167 = scalar_select %p166, %s18, 1
      %p168 = scmp.lt.s32.totalorder %s165, 15
      %s169 = scalar_select %p168, %s165, 15
      %s170 = smul.addr %s169, 2
      %s171 = smul.addr %s167, 32
      %s172 = sadd.s32 %s170, %s171
      %s173 = smul.addr %s172, 4
      %s174 = scalar_lea.vmem %s0, %s173
      %p175 = pneg %p49
      %p176 = pneg %p46
      %p177 = pneg %p70
      %p178 = pneg %p67
      %p179 = pneg %p91
      %p180 = pneg %p88
      %p181 = pneg %p119
      %p182 = pneg %p116
      %s183 = smul.u32 4, %s19
      %p184 = scmp.lt.s32.totalorder %s18, 1
      %s185 = scalar_select %p184, %s18, 1
      %p186 = scmp.lt.s32.totalorder %s183, 15
      %s187 = scalar_select %p186, %s183, 15
      %s188 = smul.addr %s187, 2
      %s189 = smul.addr %s185, 32
      %s190 = sadd.s32 %s188, %s189
      %s191 = smul.addr %s190, 8
      %s192 = scalar_lea.vmem %s3, %s191
      %s193 = smul.u32 4, %s19
      %p194 = scmp.lt.s32.totalorder %s18, 1
      %s195 = scalar_select %p194, %s18, 1
      %p196 = scmp.lt.s32.totalorder %s193, 15
      %s197 = scalar_select %p196, %s193, 15
      %s198 = smul.addr %s197, 2
      %s199 = smul.addr %s195, 32
      %s200 = sadd.s32 %s198, %s199
      %s201 = smul.addr %s200, 4
      %s202 = scalar_lea.vmem %s0, %s201
      %s203 = smul.u32 4, %s19
      %s204 = smul.u32 4, %s19
      %p205 = scmp.lt.s32.totalorder %s18, 1
      %s206 = scalar_select %p205, %s18, 1
      %p207 = scmp.lt.s32.totalorder %s204, 15
      %s208 = scalar_select %p207, %s204, 15
      %s209 = smul.addr %s208, 2
      %s210 = smul.addr %s206, 32
      %s211 = sadd.s32 %s209, %s210
      %s212 = smul.addr %s211, 8
      %s213 = scalar_lea.vmem %s3, %s212
      %s214 = smul.u32 4, %s19
      %v215 = vld [vmem:[%s202] sm:$0xf]
      %v216 = vld [vmem:[%s202 + $0x4] sm:$0xf]
      %v217 = vld [vmem:[%s202 + $0x8] sm:$0xf]
      %v218 = vld [vmem:[%s202 + $0xc] sm:$0xf]
      %v219 = vld [vmem:[%s202 + $0x10] sm:$0xf]
      %v220 = vld [vmem:[%s202 + $0x14] sm:$0xf]
      %v221 = vld [vmem:[%s202 + $0x18] sm:$0xf]
      %v222 = vld [vmem:[%s202 + $0x1c] sm:$0xf]
      %v223 = vunpack.c.l.bf16 %v215
      %v224 = vunpack.c.l.bf16 %v216
      %v225 = vunpack.c.l.bf16 %v217
      %v226 = vunpack.c.l.bf16 %v218
      %v227 = vunpack.c.l.bf16 %v219
      %v228 = vunpack.c.l.bf16 %v220
      %v229 = vunpack.c.l.bf16 %v221
      %v230 = vunpack.c.l.bf16 %v222
      %v231 = vld [vmem:[%s1] sm:$0x1]
      %v232 = vld [vmem:[%s2] sm:$0x1]
      %v234 = vperm.slane %v231, 0
      %v236 = vmul.f32 %v223, %v234
      %v237 = vmul.f32 %v224, %v234
      %v238 = vmul.f32 %v225, %v234
      %v239 = vmul.f32 %v226, %v234
      %v240 = vmul.f32 %v227, %v234
      %v241 = vmul.f32 %v228, %v234
      %v242 = vmul.f32 %v229, %v234
      %v243 = vmul.f32 %v230, %v234
      %v245 = vperm.slane %v232, 0
      %v247 = vadd.f32 %v236, %v245
      %v248 = vadd.f32 %v237, %v245
      %v249 = vadd.f32 %v238, %v245
      %v250 = vadd.f32 %v239, %v245
      %v251 = vadd.f32 %v240, %v245
      %v252 = vadd.f32 %v241, %v245
      %v253 = vadd.f32 %v242, %v245
      %v254 = vadd.f32 %v243, %v245
      %vm255 = vcmask 64512
      %256 = vst.msk [vmem:[%s213] sm:$0xff] %vm255, %v247
      %257 = vst.msk [vmem:[%s213 + $0x8] sm:$0xff] %vm255, %v248
      %258 = vst.msk [vmem:[%s213 + $0x10] sm:$0xff] %vm255, %v249
      %259 = vst.msk [vmem:[%s213 + $0x18] sm:$0xff] %vm255, %v250
      %260 = vst.msk [vmem:[%s213 + $0x20] sm:$0xff] %vm255, %v251
      %261 = vst.msk [vmem:[%s213 + $0x28] sm:$0xff] %vm255, %v252
      %262 = vst.msk [vmem:[%s213 + $0x30] sm:$0xff] %vm255, %v253
      %263 = vst.msk [vmem:[%s213 + $0x38] sm:$0xff] %vm255, %v254
      %s264 = smul.u32 4, %s19
      %p265 = scmp.lt.s32.totalorder %s18, 1
      %s266 = scalar_select %p265, %s18, 1
      %p267 = scmp.lt.s32.totalorder %s264, 15
      %s268 = scalar_select %p267, %s264, 15
      %s269 = smul.addr %s268, 2
      %s270 = smul.addr %s266, 32
      %s271 = sadd.s32 %s269, %s270
      %s272 = smul.addr %s271, 8
      %s273 = scalar_lea.vmem %s3, %s272
      // Predicated region
      $region33: #{conv_bn2d.3} parent=31 // pred_check
        %p274 = pneg %p116
      $region34: #{conv_bn2d.3} parent=31 // pred_check_branch
        %276 = sbr.rel (%p274) target = $region36
      $region35: #{conv_bn2d.3} parent=31 // pred_region
        %s277 = smul.u32 4, %s19
      $region36: #{conv_bn2d.3} parent=31 // pred_fallthru
        _
    $region32: #{conv_bn2d.3} parent=5 // pred_fallthru
      _
    %p278 = scmp.le.s32.totalorder 2, %s9
    // Predicated region
    $region37: #{conv_bn2d.3} parent=5 // pred_check
      %p279 = pneg %p278
    $region38: #{conv_bn2d.3} parent=5 // pred_check_branch
      %281 = sbr.rel (%p279) target = $region40
    $region39: #{conv_bn2d.3} parent=5 // pred_region
      %s282 = ssub.s32 %s9, 2
      // Predicated region
      $region41: #{conv_bn2d.3} parent=39 // pred_check
        %p283 = pneg %p122
      $region42: #{conv_bn2d.3} parent=39 // pred_check_branch
        %285 = sbr.rel (%p283) target = $region44
      $region43: #{conv_bn2d.3} parent=39 // pred_region
        %s286 = smul.u32 4, %s21
        %p287 = scmp.lt.s32.totalorder %s20, 1
        %s288 = scalar_select %p287, %s20, 1
        %p289 = scmp.lt.s32.totalorder %s286, 15
        %s290 = scalar_select %p289, %s286, 15
        %s291 = smul.addr %s290, 2
        %s292 = smul.addr %s288, 32
        %s293 = sadd.s32 %s291, %s292
        %s294 = smul.addr %s293, 8
        %s295 = scalar_lea.vmem %s3, %s294
      $region44: #{conv_bn2d.3} parent=39 // pred_fallthru
        _
    $region40: #{conv_bn2d.3} parent=5 // pred_fallthru
      _
  $region6: #{conv_bn2d.3} parent=0 // loop_footer
    %s13 = sadd.s32 1, %s9
  $region7: #{conv_bn2d.3} parent=0 // loop_footer_branch
    %8 = sbr.rel target = $region3
  $region8: #{conv_bn2d.3} parent=0 // loop_exit
    _

// kernel: conv_bn2d.2
$region0: #{conv_bn2d.2}
  #allocation0 [shape = 'u32[]', space=smem, size = 0x4, offset = 0x4, fixed_abs, tag = 'smem constant byte address 0x4 - core index']
  #allocation1 [shape = 'u32[72,128]{1,0:T(1,128)}', space=vmem, size = 0x9000, scoped, tag = 'internal scratch']
  #allocation2 [shape = 'bf16[6,18,4]{2,1,0:T(8,128)(2,1)}', space=vmem, size = 0x9000, scoped, tag = 'scratch operand']
  %s0 = inlined_call_operand.vmem [shape: bf16[2,18,18,4], index: 0, kind: input, shape index: {}, may-alias: {0,1,2}]
  %s1 = inlined_call_operand.vmem [shape: bf16[2,18,18,4], index: 1, kind: input, shape index: {}, may-alias: {0,1,2}]
  %s2 = inlined_call_operand.vmem [shape: bf16[2,18,18,4], index: 2, kind: input, shape index: {}, may-alias: {0,1,2}]
  %s3 = inlined_call_operand.vmem [shape: bf16[9,4,128], index: 3, kind: input, shape index: {}]
  %s4 = inlined_call_operand.vmem [shape: bf16[2,16,16,128], index: 4, kind: output, shape index: {0}]
  %s5 = inlined_call_operand.vmem [shape: f32[2,4,1,128], index: 5, kind: output, shape index: {1}]
  %s6 = inlined_call_operand.vmem [shape: f32[2,4,1,128], index: 6, kind: output, shape index: {2}]
  %7 = xla_tuple %s4, %s5, %s6
  %s8 = sld [smem:[#allocation0]]
  $region65: #{conv_bn2d.2} parent=0
    _
  %s10 = ssub.s32 1, %s8
  %s11 = scalar_select 0, %s10, %s8
  loop: start=0, step=1, limit=10
  $region2: #{conv_bn2d.2} parent=0 // loop_pre_header
    _
  $region3: #{conv_bn2d.2} parent=0 // loop_header
    %s13 = sphi 0, %s17
    %p14 = scmp.ge.s32.totalorder %s13, 10
    %s20 = sphi 0, %s32
    %s21 = sphi 0, %s28
    %s22 = sphi 0, %s20
    %s23 = sphi 0, %s21
    %s24 = sphi 0, %s22
    %s25 = sphi 0, %s23
    %s37 = sphi 0, %s39
    %s40 = sphi 0, %s37
    %s41 = sphi 0, %s40
    %s57 = sphi 0, %s41
    %s69 = sphi 0, %s71
    %s72 = sphi 0, %s69
    %s73 = sphi 0, %s72
    %s89 = sphi 0, %s73
    %s103 = sphi 0, %s105
    %s106 = sphi 0, %s103
    %s107 = sphi 0, %s106
    %s123 = sphi 0, %s107
    %s127 = sphi 0, %s127
    %s129 = sphi 0, %s127
    %s130 = sphi 0, %s129
    %s144 = sphi 0, %s130
    %s152 = sphi 0, %s154
    %s155 = sphi 0, %s152
    %s156 = sphi 0, %s155
    %s172 = sphi 0, %s156
    %s180 = sphi 0, %s182
    %s183 = sphi 0, %s180
    %s184 = sphi 0, %s183
    %s200 = sphi 0, %s184
    %s208 = sphi 0, %s210
    %s211 = sphi 0, %s208
    %s212 = sphi 0, %s211
    %s228 = sphi 0, %s212
  $region4: #{conv_bn2d.2} parent=0 // loop_header_branch
    %16 = sbr.rel (%p14) target = $region8
  $region5: #{conv_bn2d.2} parent=0 // loop_body
    %s18 = ssub.s32 %s13, 1
    %s19 = ssub.s32 %s13, 2
    %s26 = sadd.s32 1, %s21
    %p27 = scmp.ge.s32.totalorder %s26, 4
    %s28 = scalar_select %p27, 0, %s26
    %s29 = sadd.s32 1, %s20
    %s30 = scalar_select %p27, %s29, %s20
    %p31 = scmp.ge.s32.totalorder %s30, 2
    %s32 = scalar_select %p31, 0, %s30
    %s33 = ssub.s32 %s20, %s32
    %s34 = ssub.s32 %s21, %s28
    %s35 = sor.u32 %s33, %s34
    %p36 = scmp.eq.s32.totalorder %s35, 0
    %s38 = sadd.s32 %s37, 1
    %s39 = scalar_select %p36, %s37, %s38
    %p42 = pneg %p36
    %p43 = scmp.eq.s32.totalorder %s13, 7
    %p44 = por %p42, %p43
    %p45 = scmp.ne.s32.totalorder %s37, %s40
    %p46 = scmp.eq.s32.totalorder %s13, 0
    %p47 = por %p45, %p46
    %p48 = scmp.ne.s32.totalorder %s37, %s40
    %p49 = scmp.eq.s32.totalorder %s18, 7
    %p50 = por %p48, %p49
    %p51 = scmp.ne.s32.totalorder %s40, %s41
    %p52 = scmp.eq.s32.totalorder %s18, 0
    %p53 = por %p51, %p52
    %p54 = scmp.ne.s32.totalorder %s40, %s41
    %p55 = scmp.eq.s32.totalorder %s19, 7
    %p56 = por %p54, %p55
    %p58 = scmp.ne.s32.totalorder %s41, %s57
    %p59 = scmp.eq.s32.totalorder %s19, 0
    %p60 = por %p58, %p59
    %s61 = sadd.s32 %s21, 1
    %s62 = smul.u32 %s61, 4
    %s63 = sadd.s32 %s28, 1
    %s64 = smul.u32 %s63, 4
    %s65 = ssub.s32 %s20, %s32
    %s66 = ssub.s32 %s62, %s64
    %s67 = sor.u32 %s65, %s66
    %p68 = scmp.eq.s32.totalorder %s67, 0
    %s70 = sadd.s32 %s69, 1
    %s71 = scalar_select %p68, %s69, %s70
    %p74 = pneg %p68
    %p75 = scmp.eq.s32.totalorder %s13, 7
    %p76 = por %p74, %p75
    %p77 = scmp.ne.s32.totalorder %s69, %s72
    %p78 = scmp.eq.s32.totalorder %s13, 0
    %p79 = por %p77, %p78
    %p80 = scmp.ne.s32.totalorder %s69, %s72
    %p81 = scmp.eq.s32.totalorder %s18, 7
    %p82 = por %p80, %p81
    %p83 = scmp.ne.s32.totalorder %s72, %s73
    %p84 = scmp.eq.s32.totalorder %s18, 0
    %p85 = por %p83, %p84
    %p86 = scmp.ne.s32.totalorder %s72, %s73
    %p87 = scmp.eq.s32.totalorder %s19, 7
    %p88 = por %p86, %p87
    %p90 = scmp.ne.s32.totalorder %s73, %s89
    %p91 = scmp.eq.s32.totalorder %s19, 0
    %p92 = por %p90, %p91
    %s93 = sadd.s32 %s21, 1
    %s94 = smul.u32 %s93, 4
    %s95 = sadd.s32 %s94, 1
    %s96 = sadd.s32 %s28, 1
    %s97 = smul.u32 %s96, 4
    %s98 = sadd.s32 %s97, 1
    %s99 = ssub.s32 %s20, %s32
    %s100 = ssub.s32 %s95, %s98
    %s101 = sor.u32 %s99, %s100
    %p102 = scmp.eq.s32.totalorder %s101, 0
    %s104 = sadd.s32 %s103, 1
    %s105 = scalar_select %p102, %s103, %s104
    %p108 = pneg %p102
    %p109 = scmp.eq.s32.totalorder %s13, 7
    %p110 = por %p108, %p109
    %p111 = scmp.ne.s32.totalorder %s103, %s106
    %p112 = scmp.eq.s32.totalorder %s13, 0
    %p113 = por %p111, %p112
    %p114 = scmp.ne.s32.totalorder %s103, %s106
    %p115 = scmp.eq.s32.totalorder %s18, 7
    %p116 = por %p114, %p115
    %p117 = scmp.ne.s32.totalorder %s106, %s107
    %p118 = scmp.eq.s32.totalorder %s18, 0
    %p119 = por %p117, %p118
    %p120 = scmp.ne.s32.totalorder %s106, %s107
    %p121 = scmp.eq.s32.totalorder %s19, 7
    %p122 = por %p120, %p121
    %p124 = scmp.ne.s32.totalorder %s107, %s123
    %p125 = scmp.eq.s32.totalorder %s19, 0
    %p126 = por %p124, %p125
    %s128 = sadd.s32 %s127, 1
    %p131 = scmp.eq.s32.totalorder %s13, 7
    %p132 = scmp.ne.s32.totalorder %s127, %s129
    %p133 = scmp.eq.s32.totalorder %s13, 0
    %p134 = por %p132, %p133
    %p135 = scmp.ne.s32.totalorder %s127, %s129
    %p136 = scmp.eq.s32.totalorder %s18, 7
    %p137 = por %p135, %p136
    %p138 = scmp.ne.s32.totalorder %s129, %s130
    %p139 = scmp.eq.s32.totalorder %s18, 0
    %p140 = por %p138, %p139
    %p141 = scmp.ne.s32.totalorder %s129, %s130
    %p142 = scmp.eq.s32.totalorder %s19, 7
    %p143 = por %p141, %p142
    %p145 = scmp.ne.s32.totalorder %s130, %s144
    %p146 = scmp.eq.s32.totalorder %s19, 0
    %p147 = por %p145, %p146
    %s148 = ssub.s32 %s20, %s32
    %s149 = ssub.s32 %s21, %s28
    %s150 = sor.u32 %s148, %s149
    %p151 = scmp.eq.s32.totalorder %s150, 0
    %s153 = sadd.s32 %s152, 1
    %s154 = scalar_select %p151, %s152, %s153
    %p157 = pneg %p151
    %p158 = scmp.eq.s32.totalorder %s13, 7
    %p159 = por %p157, %p158
    %p160 = scmp.ne.s32.totalorder %s152, %s155
    %p161 = scmp.eq.s32.totalorder %s13, 0
    %p162 = por %p160, %p161
    %p163 = scmp.ne.s32.totalorder %s152, %s155
    %p164 = scmp.eq.s32.totalorder %s18, 7
    %p165 = por %p163, %p164
    %p166 = scmp.ne.s32.totalorder %s155, %s156
    %p167 = scmp.eq.s32.totalorder %s18, 0
    %p168 = por %p166, %p167
    %p169 = scmp.ne.s32.totalorder %s155, %s156
    %p170 = scmp.eq.s32.totalorder %s19, 7
    %p171 = por %p169, %p170
    %p173 = scmp.ne.s32.totalorder %s156, %s172
    %p174 = scmp.eq.s32.totalorder %s19, 0
    %p175 = por %p173, %p174
    %s176 = ssub.s32 %s20, %s32
    %s177 = ssub.s32 %s21, %s28
    %s178 = sor.u32 %s176, %s177
    %p179 = scmp.eq.s32.totalorder %s178, 0
    %s181 = sadd.s32 %s180, 1
    %s182 = scalar_select %p179, %s180, %s181
    %p185 = pneg %p179
    %p186 = scmp.eq.s32.totalorder %s13, 7
    %p187 = por %p185, %p186
    %p188 = scmp.ne.s32.totalorder %s180, %s183
    %p189 = scmp.eq.s32.totalorder %s13, 0
    %p190 = por %p188, %p189
    %p191 = scmp.ne.s32.totalorder %s180, %s183
    %p192 = scmp.eq.s32.totalorder %s18, 7
    %p193 = por %p191, %p192
    %p194 = scmp.ne.s32.totalorder %s183, %s184
    %p195 = scmp.eq.s32.totalorder %s18, 0
    %p196 = por %p194, %p195
    %p197 = scmp.ne.s32.totalorder %s183, %s184
    %p198 = scmp.eq.s32.totalorder %s19, 7
    %p199 = por %p197, %p198
    %p201 = scmp.ne.s32.totalorder %s184, %s200
    %p202 = scmp.eq.s32.totalorder %s19, 0
    %p203 = por %p201, %p202
    %s204 = ssub.s32 %s20, %s32
    %s205 = ssub.s32 %s21, %s28
    %s206 = sor.u32 %s204, %s205
    %p207 = scmp.eq.s32.totalorder %s206, 0
    %s209 = sadd.s32 %s208, 1
    %s210 = scalar_select %p207, %s208, %s209
    %p213 = pneg %p207
    %p214 = scmp.eq.s32.totalorder %s13, 7
    %p215 = por %p213, %p214
    %p216 = scmp.ne.s32.totalorder %s208, %s211
    %p217 = scmp.eq.s32.totalorder %s13, 0
    %p218 = por %p216, %p217
    %p219 = scmp.ne.s32.totalorder %s208, %s211
    %p220 = scmp.eq.s32.totalorder %s18, 7
    %p221 = por %p219, %p220
    %p222 = scmp.ne.s32.totalorder %s211, %s212
    %p223 = scmp.eq.s32.totalorder %s18, 0
    %p224 = por %p222, %p223
    %p225 = scmp.ne.s32.totalorder %s211, %s212
    %p226 = scmp.eq.s32.totalorder %s19, 7
    %p227 = por %p225, %p226
    %p229 = scmp.ne.s32.totalorder %s212, %s228
    %p230 = scmp.eq.s32.totalorder %s19, 0
    %p231 = por %p229, %p230
    %p232 = scmp.le.s32.totalorder 1, %s13
    %p233 = scmp.lt.s32.totalorder %s13, 9
    %p234 = pnand %p232, %p233
    %p235 = pneg %p234
    // Predicated region
    $region9: #{conv_bn2d.2} parent=5 // pred_check
      _
    $region10: #{conv_bn2d.2} parent=5 // pred_check_branch
      %237 = sbr.rel (%p234) target = $region12
    $region11: #{conv_bn2d.2} parent=5 // pred_region
      %s238 = ssub.s32 %s13, 1
      // Predicated region
      $region13: #{conv_bn2d.2} parent=11 // pred_check
        %p239 = pneg %p140
      $region14: #{conv_bn2d.2} parent=11 // pred_check_branch
        %241 = sbr.rel (%p239) target = $region16
      $region15: #{conv_bn2d.2} parent=11 // pred_region
        _
      $region16: #{conv_bn2d.2} parent=11 // pred_fallthru
        _
    $region12: #{conv_bn2d.2} parent=5 // pred_fallthru
      _
    %p242 = scmp.lt.s32.totalorder %s13, 8
    // Predicated region
    $region17: #{conv_bn2d.2} parent=5 // pred_check
      %p243 = pneg %p242
    $region18: #{conv_bn2d.2} parent=5 // pred_check_branch
      %245 = sbr.rel (%p243) target = $region20
    $region19: #{conv_bn2d.2} parent=5 // pred_region
      // Predicated region
      $region21: #{conv_bn2d.2} parent=19 // pred_check
        %p246 = pneg %p47
      $region22: #{conv_bn2d.2} parent=19 // pred_check_branch
        %248 = sbr.rel (%p246) target = $region24
      $region23: #{conv_bn2d.2} parent=19 // pred_region
        %s249 = smul.u32 4, %s21
        %s250 = ssub.s32 18, %s249
        %p251 = scmp.lt.s32.totalorder %s250, 4
        %s252 = scalar_select %p251, %s250, 4
        %s253 = smul.u32 4, %s252
        %s254 = smul.u32 %s253, 3
        %p255 = scmp.lt.s32.totalorder %s20, 1
        %s256 = scalar_select %p255, %s20, 1
        %p257 = scmp.lt.s32.totalorder %s249, 17
        %s258 = scalar_select %p257, %s249, 17
        %s259 = smul.addr %s258, 3
        %s260 = smul.addr %s256, 54
        %s261 = sadd.s32 %s259, %s260
        %s262 = smul.addr %s261, 4
        %s263 = scalar_lea.vmem %s0, %s262
        %s264 = smul.u32 4, %s21
        %s265 = ssub.s32 18, %s264
        %p266 = scmp.lt.s32.totalorder %s265, 4
        %s267 = scalar_select %p266, %s265, 4
        %s268 = smul.u32 4, %s267
        %s269 = smul.u32 %s268, 3
      $region24: #{conv_bn2d.2} parent=19 // pred_fallthru
        _
      // Predicated region
      $region25: #{conv_bn2d.2} parent=19 // pred_check
        %p270 = pneg %p79
      $region26: #{conv_bn2d.2} parent=19 // pred_check_branch
        %272 = sbr.rel (%p270) target = $region28
      $region27: #{conv_bn2d.2} parent=19 // pred_region
        %s273 = sadd.s32 %s21, 1
        %s274 = smul.u32 %s273, 4
        %p275 = scmp.lt.s32.totalorder %s20, 1
        %s276 = scalar_select %p275, %s20, 1
        %p277 = scmp.lt.s32.totalorder %s274, 17
        %s278 = scalar_select %p277, %s274, 17
        %s279 = smul.addr %s278, 3
        %s280 = smul.addr %s276, 54
        %s281 = sadd.s32 %s279, %s280
        %s282 = smul.addr %s281, 4
        %s283 = scalar_lea.vmem %s1, %s282
        %s284 = sadd.s32 %s21, 1
        %s285 = smul.u32 %s284, 4
      $region28: #{conv_bn2d.2} parent=19 // pred_fallthru
        _
      // Predicated region
      $region29: #{conv_bn2d.2} parent=19 // pred_check
        %p286 = pneg %p113
      $region30: #{conv_bn2d.2} parent=19 // pred_check_branch
        %288 = sbr.rel (%p286) target = $region32
      $region31: #{conv_bn2d.2} parent=19 // pred_region
        %s289 = sadd.s32 %s21, 1
        %s290 = smul.u32 %s289, 4
        %s291 = sadd.s32 %s290, 1
        %p292 = scmp.lt.s32.totalorder %s20, 1
        %s293 = scalar_select %p292, %s20, 1
        %p294 = scmp.lt.s32.totalorder %s291, 17
        %s295 = scalar_select %p294, %s291, 17
        %s296 = smul.addr %s295, 3
        %s297 = smul.addr %s293, 54
        %s298 = sadd.s32 %s296, %s297
        %s299 = smul.addr %s298, 4
        %s300 = scalar_lea.vmem %s2, %s299
        %s301 = sadd.s32 %s21, 1
        %s302 = smul.u32 %s301, 4
        %s303 = sadd.s32 %s302, 1
      $region32: #{conv_bn2d.2} parent=19 // pred_fallthru
        _
    $region20: #{conv_bn2d.2} parent=5 // pred_fallthru
      _
    %p304 = scmp.le.s32.totalorder 1, %s13
    %p305 = scmp.lt.s32.totalorder %s13, 9
    %p306 = pnand %p304, %p305
    %p307 = pneg %p306
    // Predicated region
    $region33: #{conv_bn2d.2} parent=5 // pred_check
      _
    $region34: #{conv_bn2d.2} parent=5 // pred_check_branch
      %309 = sbr.rel (%p306) target = $region36
    $region35: #{conv_bn2d.2} parent=5 // pred_region
      %s310 = ssub.s32 %s13, 1
      %s311 = smul.u32 4, %s23
      %s312 = ssub.s32 18, %s311
      %p313 = scmp.lt.s32.totalorder %s312, 4
      %s314 = scalar_select %p313, %s312, 4
      %s315 = smul.u32 4, %s314
      %s316 = smul.u32 %s315, 3
      %p317 = scmp.lt.s32.totalorder %s22, 1
      %s318 = scalar_select %p317, %s22, 1
      %p319 = scmp.lt.s32.totalorder %s311, 17
      %s320 = scalar_select %p319, %s311, 17
      %s321 = smul.addr %s320, 3
      %s322 = smul.addr %s318, 54
      %s323 = sadd.s32 %s321, %s322
      %s324 = smul.addr %s323, 4
      %s325 = scalar_lea.vmem %s0, %s324
      %p326 = pneg %p53
      %p327 = pneg %p50
      %s328 = sadd.s32 %s23, 1
      %s329 = smul.u32 %s328, 4
      %p330 = scmp.lt.s32.totalorder %s22, 1
      %s331 = scalar_select %p330, %s22, 1
      %p332 = scmp.lt.s32.totalorder %s329, 17
      %s333 = scalar_select %p332, %s329, 17
      %s334 = smul.addr %s333, 3
      %s335 = smul.addr %s331, 54
      %s336 = sadd.s32 %s334, %s335
      %s337 = smul.addr %s336, 4
      %s338 = scalar_lea.vmem %s1, %s337
      %p339 = pneg %p85
      %p340 = pneg %p82
      %s341 = sadd.s32 %s23, 1
      %s342 = smul.u32 %s341, 4
      %s343 = sadd.s32 %s342, 1
      %p344 = scmp.lt.s32.totalorder %s22, 1
      %s345 = scalar_select %p344, %s22, 1
      %p346 = scmp.lt.s32.totalorder %s343, 17
      %s347 = scalar_select %p346, %s343, 17
      %s348 = smul.addr %s347, 3
      %s349 = smul.addr %s345, 54
      %s350 = sadd.s32 %s348, %s349
      %s351 = smul.addr %s350, 4
      %s352 = scalar_lea.vmem %s2, %s351
      %p353 = pneg %p119
      %p354 = pneg %p116
      %p355 = pneg %p140
      %p356 = pneg %p137
      %p357 = pneg %p168
      %p358 = pneg %p165
      %s359 = smul.u32 4, %s23
      %p360 = scmp.lt.s32.totalorder %s22, 1
      %s361 = scalar_select %p360, %s22, 1
      %p362 = scmp.lt.s32.totalorder %s359, 15
      %s363 = scalar_select %p362, %s359, 15
      %s364 = smul.addr %s363, 2
      %s365 = smul.addr %s361, 32
      %s366 = sadd.s32 %s364, %s365
      %s367 = smul.addr %s366, 4
      %s368 = scalar_lea.vmem %s4, %s367
      %p369 = pneg %p196
      %p370 = pneg %p193
      %p371 = scmp.lt.s32.totalorder %s22, 1
      %s372 = scalar_select %p371, %s22, 1
      %p373 = scmp.lt.s32.totalorder %s23, 3
      %s374 = scalar_select %p373, %s23, 3
      %s375 = smul.addr %s372, 4
      %s376 = sadd.s32 %s374, %s375
      %s377 = scalar_lea.vmem %s5, %s376
      %p378 = pneg %p224
      %p379 = pneg %p221
      %p380 = scmp.lt.s32.totalorder %s22, 1
      %s381 = scalar_select %p380, %s22, 1
      %p382 = scmp.lt.s32.totalorder %s23, 3
      %s383 = scalar_select %p382, %s23, 3
      %s384 = smul.addr %s381, 4
      %s385 = sadd.s32 %s383, %s384
      %s386 = scalar_lea.vmem %s6, %s385
      %s387 = smul.u32 4, %s23
      %s388 = ssub.s32 18, %s387
      %p389 = scmp.lt.s32.totalorder %s388, 4
      %s390 = scalar_select %p389, %s388, 4
      %s391 = smul.u32 4, %s390
      %s392 = smul.u32 %s391, 3
      %p393 = scmp.lt.s32.totalorder %s22, 1
      %s394 = scalar_select %p393, %s22, 1
      %p395 = scmp.lt.s32.totalorder %s387, 17
      %s396 = scalar_select %p395, %s387, 17
      %s397 = smul.addr %s396, 3
      %s398 = smul.addr %s394, 54
      %s399 = sadd.s32 %s397, %s398
      %s400 = smul.addr %s399, 4
      %s401 = scalar_lea.vmem %s0, %s400
      %s402 = smul.u32 4, %s23
      %s403 = ssub.s32 18, %s402
      %p404 = scmp.lt.s32.totalorder %s403, 4
      %s405 = scalar_select %p404, %s403, 4
      %s406 = smul.u32 4, %s405
      %s407 = smul.u32 %s406, 3
      %s408 = sadd.s32 %s23, 1
      %s409 = smul.u32 %s408, 4
      %p410 = scmp.lt.s32.totalorder %s22, 1
      %s411 = scalar_select %p410, %s22, 1
      %p412 = scmp.lt.s32.totalorder %s409, 17
      %s413 = scalar_select %p412, %s409, 17
      %s414 = smul.addr %s413, 3
      %s415 = smul.addr %s411, 54
      %s416 = sadd.s32 %s414, %s415
      %s417 = smul.addr %s416, 4
      %s418 = scalar_lea.vmem %s1, %s417
      %s419 = sadd.s32 %s23, 1
      %s420 = smul.u32 %s419, 4
      %s421 = sadd.s32 %s23, 1
      %s422 = smul.u32 %s421, 4
      %s423 = sadd.s32 %s422, 1
      %p424 = scmp.lt.s32.totalorder %s22, 1
      %s425 = scalar_select %p424, %s22, 1
      %p426 = scmp.lt.s32.totalorder %s423, 17
      %s427 = scalar_select %p426, %s423, 17
      %s428 = smul.addr %s427, 3
      %s429 = smul.addr %s425, 54
      %s430 = sadd.s32 %s428, %s429
      %s431 = smul.addr %s430, 4
      %s432 = scalar_lea.vmem %s2, %s431
      %s433 = sadd.s32 %s23, 1
      %s434 = smul.u32 %s433, 4
      %s435 = sadd.s32 %s434, 1
      %s436 = smul.u32 4, %s23
      %p437 = scmp.lt.s32.totalorder %s22, 1
      %s438 = scalar_select %p437, %s22, 1
      %p439 = scmp.lt.s32.totalorder %s436, 15
      %s440 = scalar_select %p439, %s436, 15
      %s441 = smul.addr %s440, 2
      %s442 = smul.addr %s438, 32
      %s443 = sadd.s32 %s441, %s442
      %s444 = smul.addr %s443, 4
      %s445 = scalar_lea.vmem %s4, %s444
      %s446 = smul.u32 4, %s23
      %p447 = scmp.lt.s32.totalorder %s22, 1
      %s448 = scalar_select %p447, %s22, 1
      %p449 = scmp.lt.s32.totalorder %s23, 3
      %s450 = scalar_select %p449, %s23, 3
      %s451 = smul.addr %s448, 4
      %s452 = sadd.s32 %s450, %s451
      %s453 = scalar_lea.vmem %s5, %s452
      %p454 = scmp.lt.s32.totalorder %s22, 1
      %s455 = scalar_select %p454, %s22, 1
      %p456 = scmp.lt.s32.totalorder %s23, 3
      %s457 = scalar_select %p456, %s23, 3
      %s458 = smul.addr %s455, 4
      %s459 = sadd.s32 %s457, %s458
      %s460 = scalar_lea.vmem %s6, %s459
      %v462 = vld [vmem:[%s401] sm:$0xf]
      %v463 = vld [vmem:[%s401 + $0x4] sm:$0xf]
      %v464 = vld [vmem:[%s401 + $0x8] sm:$0x1]
      %v465 = vld [vmem:[%s401 + $0xc] sm:$0xf]
      %v466 = vld [vmem:[%s401 + $0x10] sm:$0xf]
      %v467 = vld [vmem:[%s401 + $0x14] sm:$0x1]
      %v468 = vld [vmem:[%s401 + $0x18] sm:$0xf]
      %v469 = vld [vmem:[%s401 + $0x1c] sm:$0xf]
      %v470 = vld [vmem:[%s401 + $0x20] sm:$0x1]
      %v471 = vld [vmem:[%s401 + $0x24] sm:$0xf]
      %v472 = vld [vmem:[%s401 + $0x28] sm:$0xf]
      %v473 = vld [vmem:[%s401 + $0x2c] sm:$0x1]
      %vm474 = vcmask 27648
      %475 = vst.msk [vmem:[#allocation2] sm:$0xf] %vm474, %v462
      %476 = vst.msk [vmem:[#allocation2 + $0x4] sm:$0xf] %vm474, %v463
      %vm477 = vcmask 24576
      %478 = vst.msk [vmem:[#allocation2 + $0x8] sm:$0x1] %vm477, %v464
      %479 = vst.msk [vmem:[#allocation2 + $0xc] sm:$0xf] %vm474, %v465
      %480 = vst.msk [vmem:[#allocation2 + $0x10] sm:$0xf] %vm474, %v466
      %481 = vst.msk [vmem:[#allocation2 + $0x14] sm:$0x1] %vm477, %v467
      %482 = vst.msk [vmem:[#allocation2 + $0x18] sm:$0xf] %vm474, %v468
      %483 = vst.msk [vmem:[#allocation2 + $0x1c] sm:$0xf] %vm474, %v469
      %484 = vst.msk [vmem:[#allocation2 + $0x20] sm:$0x1] %vm477, %v470
      %485 = vst.msk [vmem:[#allocation2 + $0x24] sm:$0xf] %vm474, %v471
      %486 = vst.msk [vmem:[#allocation2 + $0x28] sm:$0xf] %vm474, %v472
      %487 = vst.msk [vmem:[#allocation2 + $0x2c] sm:$0x1] %vm477, %v473
      %v488 = vld [vmem:[%s418] sm:$0xf]
      %v489 = vld [vmem:[%s418 + $0x4] sm:$0xf]
      %v490 = vld [vmem:[%s418 + $0x8] sm:$0x1]
      %s491 = scalar_lea.vmem [#allocation2], 48
      %492 = vst.msk [vmem:[%s491] sm:$0xf] %vm474, %v488
      %493 = vst.msk [vmem:[%s491 + $0x4] sm:$0xf] %vm474, %v489
      %494 = vst.msk [vmem:[%s491 + $0x8] sm:$0x1] %vm477, %v490
      %v495 = vld [vmem:[%s432] sm:$0xf]
      %v496 = vld [vmem:[%s432 + $0x4] sm:$0xf]
      %v497 = vld [vmem:[%s432 + $0x8] sm:$0x1]
      %s498 = scalar_lea.vmem [#allocation2], 60
      %499 = vst.msk [vmem:[%s498] sm:$0xf] %vm474, %v495
      %500 = vst.msk [vmem:[%s498 + $0x4] sm:$0xf] %vm474, %v496
      %501 = vst.msk [vmem:[%s498 + $0x8] sm:$0x1] %vm477, %v497
      %v502 = vld [vmem:[#allocation2] sm:$0xf]
      %v503 = vld [vmem:[#allocation2 + $0x4] sm:$0xf]
      %v504 = vld [vmem:[#allocation2 + $0xc] sm:$0xf]
      %v505 = vld [vmem:[#allocation2 + $0x10] sm:$0xf]
      %v506 = vld [vmem:[#allocation2 + $0x18] sm:$0xf]
      %v507 = vld [vmem:[#allocation2 + $0x1c] sm:$0xf]
      %v508 = vld [vmem:[#allocation2 + $0x24] sm:$0xf]
      %v509 = vld [vmem:[#allocation2 + $0x28] sm:$0xf]
      %v510 = vld [vmem:[%s3] sm:$0x3]
      %v511 = vld [vmem:[#allocation2 + $0x8] sm:$0x1]
      %v512 = vld [vmem:[#allocation2 + $0x14] sm:$0x1]
      %v513 = vld [vmem:[#allocation2 + $0x20] sm:$0x1]
      %v514 = vld [vmem:[#allocation2 + $0x2c] sm:$0x1]
      %vm515 = vsmask.f32 3328
      %vm516 = vsmask.f32 7440
      %vm517 = vmor %vm515, %vm516
      %v519 = vshrl.u32 %v502, 16
      %v521 = vrot.slane %v519, 4
      %v522 = vshll.u32 %v502, 16
      %v524 = vrot.slane %v522, 5
      %v525 = vor.u32 %v521, %v524
      %v526 = vrot.slane %v525, 4
      %v528 = vshll.u32 %v503, 16
      %v530 = vrot.slane %v528, 5
      %v531 = vsel %vm517, %v526, %v530
      %v532 = vshrl.u32 %v503, 16
      %v534 = vrot.slane %v532, 4
      %v535 = vor.u32 %v534, %v530
      %v536 = vrot.slane %v535, 4
      %v538 = vshll.u32 %v511, 16
      %v540 = vrot.slane %v538, 5
      %v541 = vsel %vm517, %v536, %v540
      %v543 = vshrl.u32 %v504, 16
      %v545 = vrot.slane %v543, 4
      %v546 = vshll.u32 %v504, 16
      %v548 = vrot.slane %v546, 5
      %v549 = vor.u32 %v545, %v548
      %v550 = vrot.slane %v549, 4
      %v552 = vshll.u32 %v505, 16
      %v554 = vrot.slane %v552, 5
      %v555 = vsel %vm517, %v550, %v554
      %v556 = vshrl.u32 %v505, 16
      %v558 = vrot.slane %v556, 4
      %v559 = vor.u32 %v558, %v554
      %v560 = vrot.slane %v559, 4
      %v562 = vshll.u32 %v512, 16
      %v564 = vrot.slane %v562, 5
      %v565 = vsel %vm517, %v560, %v564
      %v567 = vshrl.u32 %v506, 16
      %v569 = vrot.slane %v567, 4
      %v570 = vshll.u32 %v506, 16
      %v572 = vrot.slane %v570, 5
      %v573 = vor.u32 %v569, %v572
      %v574 = vrot.slane %v573, 4
      %v576 = vshll.u32 %v507, 16
      %v578 = vrot.slane %v576, 5
      %v579 = vsel %vm517, %v574, %v578
      %v580 = vshrl.u32 %v507, 16
      %v582 = vrot.slane %v580, 4
      %v583 = vor.u32 %v582, %v578
      %v584 = vrot.slane %v583, 4
      %v586 = vshll.u32 %v513, 16
      %v588 = vrot.slane %v586, 5
      %v589 = vsel %vm517, %v584, %v588
      %v591 = vshrl.u32 %v508, 16
      %v593 = vrot.slane %v591, 4
      %v594 = vshll.u32 %v508, 16
      %v596 = vrot.slane %v594, 5
      %v597 = vor.u32 %v593, %v596
      %v598 = vrot.slane %v597, 4
      %v600 = vshll.u32 %v509, 16
      %v602 = vrot.slane %v600, 5
      %v603 = vsel %vm517, %v598, %v602
      %v604 = vshrl.u32 %v509, 16
      %v606 = vrot.slane %v604, 4
      %v607 = vor.u32 %v606, %v602
      %v608 = vrot.slane %v607, 4
      %v610 = vshll.u32 %v514, 16
      %v612 = vrot.slane %v610, 5
      %v613 = vsel %vm517, %v608, %v612
      %s614 = scalar_lea.vmem %s3, 2
      %v615 = vld [vmem:[%s614] sm:$0x3]
      %v616 = vunpack.c.l.b16 %v531
      %v617 = vunpack.c.l.b16 %v541
      %v618 = vunpack.c.l.b16 %v555
      %v619 = vunpack.c.l.b16 %v565
      %v620 = vunpack.c.l.b16 %v579
      %v621 = vunpack.c.l.b16 %v589
      %v622 = vunpack.c.l.b16 %v603
      %v623 = vunpack.c.l.b16 %v613
      %v624 = vpack.c.b16 %v617, %v616
      %v625 = vpack.c.b16 %v619, %v618
      %v626 = vpack.c.b16 %v621, %v620
      %v627 = vpack.c.b16 %v623, %v622
      %vm628 = vcmask 31744
      %v630 = vsel %vm628, %v624, 0
      %v633 = vsel %vm628, %v625, 0
      %v636 = vsel %vm628, %v626, 0
      %v639 = vsel %vm628, %v627, 0
      %vm641 = vcmask 1041408
      %v643 = vsel %vm641, %v615, 0
      %645 = vmatpush.bf16.msra.mxu0 0
      %646 = vmatpush.bf16.msra.mxu0 0
      %647 = vmatpush.bf16.msra.mxu0 0
      %648 = vmatpush.bf16.msra.mxu0 0
      %649 = vmatpush.bf16.msra.mxu0 0
      %650 = vmatpush.bf16.msra.mxu0 0
      %651 = vmatpush.bf16.msra.mxu0 0
      %652 = vmatpush.bf16.msra.mxu0 %v643
      %653 = vmatmul.bf16.gmra.mxu0 %v630
      %v654 = vpop.f32.mrf.mxu0
      %v655 = vadd.f32 0.0, %v654
      %v656 = vpop.f32.mrf.mxu0
      %v657 = vadd.f32 0.0, %v656
      %658 = vmatmul.bf16.gmra.mxu0 %v633
      %v659 = vpop.f32.mrf.mxu0
      %v660 = vadd.f32 0.0, %v659
      %v661 = vpop.f32.mrf.mxu0
      %v662 = vadd.f32 0.0, %v661
      %663 = vmatmul.bf16.gmra.mxu0 %v636
      %v664 = vpop.f32.mrf.mxu0
      %v665 = vadd.f32 0.0, %v664
      %v666 = vpop.f32.mrf.mxu0
      %v667 = vadd.f32 0.0, %v666
      %668 = vmatmul.bf16.gmra.mxu0 %v639
      %v669 = vpop.f32.mrf.mxu0
      %v670 = vadd.f32 0.0, %v669
      %v671 = vpop.f32.mrf.mxu0
      %v672 = vadd.f32 0.0, %v671
      %673 = vdwg.mxu0
      %v682 = vunpack.c.l.b16 %v502
      %v683 = vunpack.c.l.b16 %v503
      %v684 = vunpack.c.l.b16 %v504
      %v685 = vunpack.c.l.b16 %v505
      %v686 = vunpack.c.l.b16 %v506
      %v687 = vunpack.c.l.b16 %v507
      %v688 = vunpack.c.l.b16 %v508
      %v689 = vunpack.c.l.b16 %v509
      %v690 = vpack.c.b16 %v683, %v682
      %v691 = vpack.c.b16 %v685, %v684
      %v692 = vpack.c.b16 %v687, %v686
      %v693 = vpack.c.b16 %v689, %v688
      %v695 = vsel %vm628, %v690, 0
      %v698 = vsel %vm628, %v691, 0
      %v701 = vsel %vm628, %v692, 0
      %v704 = vsel %vm628, %v693, 0
      %v707 = vsel %vm641, %v510, 0
      %709 = vmatpush.bf16.msra.mxu0 0
      %710 = vmatpush.bf16.msra.mxu0 0
      %711 = vmatpush.bf16.msra.mxu0 0
      %712 = vmatpush.bf16.msra.mxu0 0
      %713 = vmatpush.bf16.msra.mxu0 0
      %714 = vmatpush.bf16.msra.mxu0 0
      %715 = vmatpush.bf16.msra.mxu0 0
      %716 = vmatpush.bf16.msra.mxu0 %v707
      %717 = vmatmul.bf16.gmra.mxu0 %v695
      %v718 = vpop.f32.mrf.mxu0
      %v719 = vadd.f32 %v655, %v718
      %v720 = vpop.f32.mrf.mxu0
      %v721 = vadd.f32 %v657, %v720
      %722 = vmatmul.bf16.gmra.mxu0 %v698
      %v723 = vpop.f32.mrf.mxu0
      %v724 = vadd.f32 %v660, %v723
      %v725 = vpop.f32.mrf.mxu0
      %v726 = vadd.f32 %v662, %v725
      %727 = vmatmul.bf16.gmra.mxu0 %v701
      %v728 = vpop.f32.mrf.mxu0
      %v729 = vadd.f32 %v665, %v728
      %v730 = vpop.f32.mrf.mxu0
      %v731 = vadd.f32 %v667, %v730
      %732 = vmatmul.bf16.gmra.mxu0 %v704
      %v733 = vpop.f32.mrf.mxu0
      %v734 = vadd.f32 %v670, %v733
      %v735 = vpop.f32.mrf.mxu0
      %v736 = vadd.f32 %v672, %v735
      %737 = vdwg.mxu0
      %v738 = vld [vmem:[#allocation2] sm:$0xe]
      %v739 = vld [vmem:[#allocation2 + $0xc] sm:$0xe]
      %v740 = vld [vmem:[#allocation2 + $0x18] sm:$0xe]
      %v741 = vld [vmem:[#allocation2 + $0x24] sm:$0xe]
      %vm750 = vcmask 1042432
      %vm751 = vcmask 1046532
      %vm752 = vmor %vm750, %vm751
      %v753 = vrot.slane %v738, 5
      %v754 = vrot.slane %v753, 4
      %v755 = vrot.slane %v503, 5
      %v756 = vsel %vm752, %v754, %v755
      %v757 = vrot.slane %v755, 4
      %v758 = vrot.slane %v511, 5
      %v759 = vsel %vm752, %v757, %v758
      %v760 = vrot.slane %v739, 5
      %v761 = vrot.slane %v760, 4
      %v762 = vrot.slane %v505, 5
      %v763 = vsel %vm752, %v761, %v762
      %v764 = vrot.slane %v762, 4
      %v765 = vrot.slane %v512, 5
      %v766 = vsel %vm752, %v764, %v765
      %v767 = vrot.slane %v740, 5
      %v768 = vrot.slane %v767, 4
      %v769 = vrot.slane %v507, 5
      %v770 = vsel %vm752, %v768, %v769
      %v771 = vrot.slane %v769, 4
      %v772 = vrot.slane %v513, 5
      %v773 = vsel %vm752, %v771, %v772
      %v774 = vrot.slane %v741, 5
      %v775 = vrot.slane %v774, 4
      %v776 = vrot.slane %v509, 5
      %v777 = vsel %vm752, %v775, %v776
      %v778 = vrot.slane %v776, 4
      %v779 = vrot.slane %v514, 5
      %v780 = vsel %vm752, %v778, %v779
      %s781 = scalar_lea.vmem %s3, 4
      %v782 = vld [vmem:[%s781] sm:$0x3]
      %v783 = vunpack.c.l.b16 %v756
      %v784 = vunpack.c.l.b16 %v759
      %v785 = vunpack.c.l.b16 %v763
      %v786 = vunpack.c.l.b16 %v766
      %v787 = vunpack.c.l.b16 %v770
      %v788 = vunpack.c.l.b16 %v773
      %v789 = vunpack.c.l.b16 %v777
      %v790 = vunpack.c.l.b16 %v780
      %v791 = vpack.c.b16 %v784, %v783
      %v792 = vpack.c.b16 %v786, %v785
      %v793 = vpack.c.b16 %v788, %v787
      %v794 = vpack.c.b16 %v790, %v789
      %v796 = vsel %vm628, %v791, 0
      %v799 = vsel %vm628, %v792, 0
      %v802 = vsel %vm628, %v793, 0
      %v805 = vsel %vm628, %v794, 0
      %v808 = vsel %vm641, %v782, 0
      %810 = vmatpush.bf16.msra.mxu0 0
      %811 = vmatpush.bf16.msra.mxu0 0
      %812 = vmatpush.bf16.msra.mxu0 0
      %813 = vmatpush.bf16.msra.mxu0 0
      %814 = vmatpush.bf16.msra.mxu0 0
      %815 = vmatpush.bf16.msra.mxu0 0
      %816 = vmatpush.bf16.msra.mxu0 0
      %817 = vmatpush.bf16.msra.mxu0 %v808
      %818 = vmatmul.bf16.gmra.mxu0 %v796
      %v819 = vpop.f32.mrf.mxu0
      %v820 = vadd.f32 0.0, %v819
      %v821 = vpop.f32.mrf.mxu0
      %v822 = vadd.f32 0.0, %v821
      %823 = vmatmul.bf16.gmra.mxu0 %v799
      %v824 = vpop.f32.mrf.mxu0
      %v825 = vadd.f32 0.0, %v824
      %v826 = vpop.f32.mrf.mxu0
      %v827 = vadd.f32 0.0, %v826
      %828 = vmatmul.bf16.gmra.mxu0 %v802
      %v829 = vpop.f32.mrf.mxu0
      %v830 = vadd.f32 0.0, %v829
      %v831 = vpop.f32.mrf.mxu0
      %v832 = vadd.f32 0.0, %v831
      %833 = vmatmul.bf16.gmra.mxu0 %v805
      %v834 = vpop.f32.mrf.mxu0
      %v835 = vadd.f32 0.0, %v834
      %v836 = vpop.f32.mrf.mxu0
      %v837 = vadd.f32 0.0, %v836
      %838 = vdwg.mxu0
      %v839 = vadd.f32 %v719, %v820
      %v840 = vadd.f32 %v721, %v822
      %v841 = vadd.f32 %v724, %v825
      %v842 = vadd.f32 %v726, %v827
      %v843 = vadd.f32 %v729, %v830
      %v844 = vadd.f32 %v731, %v832
      %v845 = vadd.f32 %v734, %v835
      %v846 = vadd.f32 %v736, %v837
      %s847 = scalar_lea.vmem [#allocation2], 12
      %v848 = vld [vmem:[%s847] sm:$0xf]
      %v849 = vld [vmem:[%s847 + $0x4] sm:$0xf]
      %v850 = vld [vmem:[%s847 + $0xc] sm:$0xf]
      %v851 = vld [vmem:[%s847 + $0x10] sm:$0xf]
      %v852 = vld [vmem:[%s847 + $0x18] sm:$0xf]
      %v853 = vld [vmem:[%s847 + $0x1c] sm:$0xf]
      %v854 = vld [vmem:[%s847 + $0x24] sm:$0xf]
      %v855 = vld [vmem:[%s847 + $0x28] sm:$0xf]
      %s856 = scalar_lea.vmem %s3, 6
      %v857 = vld [vmem:[%s856] sm:$0x3]
      %v866 = vunpack.c.l.b16 %v848
      %v867 = vunpack.c.l.b16 %v849
      %v868 = vunpack.c.l.b16 %v850
      %v869 = vunpack.c.l.b16 %v851
      %v870 = vunpack.c.l.b16 %v852
      %v871 = vunpack.c.l.b16 %v853
      %v872 = vunpack.c.l.b16 %v854
      %v873 = vunpack.c.l.b16 %v855
      %v874 = vpack.c.b16 %v867, %v866
      %v875 = vpack.c.b16 %v869, %v868
      %v876 = vpack.c.b16 %v871, %v870
      %v877 = vpack.c.b16 %v873, %v872
      %v879 = vsel %vm628, %v874, 0
      %v882 = vsel %vm628, %v875, 0
      %v885 = vsel %vm628, %v876, 0
      %v888 = vsel %vm628, %v877, 0
      %v891 = vsel %vm641, %v857, 0
      %893 = vmatpush.bf16.msra.mxu0 0
      %894 = vmatpush.bf16.msra.mxu0 0
      %895 = vmatpush.bf16.msra.mxu0 0
      %896 = vmatpush.bf16.msra.mxu0 0
      %897 = vmatpush.bf16.msra.mxu0 0
      %898 = vmatpush.bf16.msra.mxu0 0
      %899 = vmatpush.bf16.msra.mxu0 0
      %900 = vmatpush.bf16.msra.mxu0 %v891
      %901 = vmatmul.bf16.gmra.mxu0 %v879
      %v902 = vpop.f32.mrf.mxu0
      %v903 = vadd.f32 0.0, %v902
      %v904 = vpop.f32.mrf.mxu0
      %v905 = vadd.f32 0.0, %v904
      %906 = vmatmul.bf16.gmra.mxu0 %v882
      %v907 = vpop.f32.mrf.mxu0
      %v908 = vadd.f32 0.0, %v907
      %v909 = vpop.f32.mrf.mxu0
      %v910 = vadd.f32 0.0, %v909
      %911 = vmatmul.bf16.gmra.mxu0 %v885
      %v912 = vpop.f32.mrf.mxu0
      %v913 = vadd.f32 0.0, %v912
      %v914 = vpop.f32.mrf.mxu0
      %v915 = vadd.f32 0.0, %v914
      %916 = vmatmul.bf16.gmra.mxu0 %v888
      %v917 = vpop.f32.mrf.mxu0
      %v918 = vadd.f32 0.0, %v917
      %v919 = vpop.f32.mrf.mxu0
      %v920 = vadd.f32 0.0, %v919
      %921 = vdwg.mxu0
      %v922 = vadd.f32 %v839, %v903
      %v923 = vadd.f32 %v840, %v905
      %v924 = vadd.f32 %v841, %v908
      %v925 = vadd.f32 %v842, %v910
      %v926 = vadd.f32 %v843, %v913
      %v927 = vadd.f32 %v844, %v915
      %v928 = vadd.f32 %v845, %v918
      %v929 = vadd.f32 %v846, %v920
      %v930 = vld [vmem:[%s847] sm:$0xf]
      %v931 = vld [vmem:[%s847 + $0x4] sm:$0xf]
      %v932 = vld [vmem:[%s847 + $0x8] sm:$0x1]
      %v933 = vld [vmem:[%s847 + $0xc] sm:$0xf]
      %v934 = vld [vmem:[%s847 + $0x10] sm:$0xf]
      %v935 = vld [vmem:[%s847 + $0x14] sm:$0x1]
      %v936 = vld [vmem:[%s847 + $0x18] sm:$0xf]
      %v937 = vld [vmem:[%s847 + $0x1c] sm:$0xf]
      %v938 = vld [vmem:[%s847 + $0x20] sm:$0x1]
      %v939 = vld [vmem:[%s847 + $0x24] sm:$0xf]
      %v940 = vld [vmem:[%s847 + $0x28] sm:$0xf]
      %v941 = vld [vmem:[%s847 + $0x2c] sm:$0x1]
      %v943 = vshrl.u32 %v930, 16
      %v945 = vrot.slane %v943, 4
      %v946 = vshll.u32 %v930, 16
      %v948 = vrot.slane %v946, 5
      %v949 = vor.u32 %v945, %v948
      %v950 = vrot.slane %v949, 4
      %v952 = vshll.u32 %v931, 16
      %v954 = vrot.slane %v952, 5
      %v955 = vsel %vm517, %v950, %v954
      %v956 = vshrl.u32 %v931, 16
      %v958 = vrot.slane %v956, 4
      %v959 = vor.u32 %v958, %v954
      %v960 = vrot.slane %v959, 4
      %v962 = vshll.u32 %v932, 16
      %v964 = vrot.slane %v962, 5
      %v965 = vsel %vm517, %v960, %v964
      %v967 = vshrl.u32 %v933, 16
      %v969 = vrot.slane %v967, 4
      %v970 = vshll.u32 %v933, 16
      %v972 = vrot.slane %v970, 5
      %v973 = vor.u32 %v969, %v972
      %v974 = vrot.slane %v973, 4
      %v976 = vshll.u32 %v934, 16
      %v978 = vrot.slane %v976, 5
      %v979 = vsel %vm517, %v974, %v978
      %v980 = vshrl.u32 %v934, 16
      %v982 = vrot.slane %v980, 4
      %v983 = vor.u32 %v982, %v978
      %v984 = vrot.slane %v983, 4
      %v986 = vshll.u32 %v935, 16
      %v988 = vrot.slane %v986, 5
      %v989 = vsel %vm517, %v984, %v988
      %v991 = vshrl.u32 %v936, 16
      %v993 = vrot.slane %v991, 4
      %v994 = vshll.u32 %v936, 16
      %v996 = vrot.slane %v994, 5
      %v997 = vor.u32 %v993, %v996
      %v998 = vrot.slane %v997, 4
      %v1000 = vshll.u32 %v937, 16
      %v1002 = vrot.slane %v1000, 5
      %v1003 = vsel %vm517, %v998, %v1002
      %v1004 = vshrl.u32 %v937, 16
      %v1006 = vrot.slane %v1004, 4
      %v1007 = vor.u32 %v1006, %v1002
      %v1008 = vrot.slane %v1007, 4
      %v1010 = vshll.u32 %v938, 16
      %v1012 = vrot.slane %v1010, 5
      %v1013 = vsel %vm517, %v1008, %v1012
      %v1015 = vshrl.u32 %v939, 16
      %v1017 = vrot.slane %v1015, 4
      %v1018 = vshll.u32 %v939, 16
      %v1020 = vrot.slane %v1018, 5
      %v1021 = vor.u32 %v1017, %v1020
      %v1022 = vrot.slane %v1021, 4
      %v1024 = vshll.u32 %v940, 16
      %v1026 = vrot.slane %v1024, 5
      %v1027 = vsel %vm517, %v1022, %v1026
      %v1028 = vshrl.u32 %v940, 16
      %v1030 = vrot.slane %v1028, 4
      %v1031 = vor.u32 %v1030, %v1026
      %v1032 = vrot.slane %v1031, 4
      %v1034 = vshll.u32 %v941, 16
      %v1036 = vrot.slane %v1034, 5
      %v1037 = vsel %vm517, %v1032, %v1036
      %s1038 = scalar_lea.vmem %s3, 8
      %v1039 = vld [vmem:[%s1038] sm:$0x3]
      %v1040 = vunpack.c.l.b16 %v955
      %v1041 = vunpack.c.l.b16 %v965
      %v1042 = vunpack.c.l.b16 %v979
      %v1043 = vunpack.c.l.b16 %v989
      %v1044 = vunpack.c.l.b16 %v1003
      %v1045 = vunpack.c.l.b16 %v1013
      %v1046 = vunpack.c.l.b16 %v1027
      %v1047 = vunpack.c.l.b16 %v1037
      %v1048 = vpack.c.b16 %v1041, %v1040
      %v1049 = vpack.c.b16 %v1043, %v1042
      %v1050 = vpack.c.b16 %v1045, %v1044
      %v1051 = vpack.c.b16 %v1047, %v1046
      %v1053 = vsel %vm628, %v1048, 0
      %v1056 = vsel %vm628, %v1049, 0
      %v1059 = vsel %vm628, %v1050, 0
      %v1062 = vsel %vm628, %v1051, 0
      %v1065 = vsel %vm641, %v1039, 0
      %1067 = vmatpush.bf16.msra.mxu0 0
      %1068 = vmatpush.bf16.msra.mxu0 0
      %1069 = vmatpush.bf16.msra.mxu0 0
      %1070 = vmatpush.bf16.msra.mxu0 0
      %1071 = vmatpush.bf16.msra.mxu0 0
      %1072 = vmatpush.bf16.msra.mxu0 0
      %1073 = vmatpush.bf16.msra.mxu0 0
      %1074 = vmatpush.bf16.msra.mxu0 %v1065
      %1075 = vmatmul.bf16.gmra.mxu0 %v1053
      %v1076 = vpop.f32.mrf.mxu0
      %v1077 = vadd.f32 0.0, %v1076
      %v1078 = vpop.f32.mrf.mxu0
      %v1079 = vadd.f32 0.0, %v1078
      %1080 = vmatmul.bf16.gmra.mxu0 %v1056
      %v1081 = vpop.f32.mrf.mxu0
      %v1082 = vadd.f32 0.0, %v1081
      %v1083 = vpop.f32.mrf.mxu0
      %v1084 = vadd.f32 0.0, %v1083
      %1085 = vmatmul.bf16.gmra.mxu0 %v1059
      %v1086 = vpop.f32.mrf.mxu0
      %v1087 = vadd.f32 0.0, %v1086
      %v1088 = vpop.f32.mrf.mxu0
      %v1089 = vadd.f32 0.0, %v1088
      %1090 = vmatmul.bf16.gmra.mxu0 %v1062
      %v1091 = vpop.f32.mrf.mxu0
      %v1092 = vadd.f32 0.0, %v1091
      %v1093 = vpop.f32.mrf.mxu0
      %v1094 = vadd.f32 0.0, %v1093
      %1095 = vdwg.mxu0
      %v1096 = vadd.f32 %v922, %v1077
      %v1097 = vadd.f32 %v923, %v1079
      %v1098 = vadd.f32 %v924, %v1082
      %v1099 = vadd.f32 %v925, %v1084
      %v1100 = vadd.f32 %v926, %v1087
      %v1101 = vadd.f32 %v927, %v1089
      %v1102 = vadd.f32 %v928, %v1092
      %v1103 = vadd.f32 %v929, %v1094
      %v1104 = vld [vmem:[%s847] sm:$0xe]
      %v1105 = vld [vmem:[%s847 + $0xc] sm:$0xe]
      %v1106 = vld [vmem:[%s847 + $0x18] sm:$0xe]
      %v1107 = vld [vmem:[%s847 + $0x24] sm:$0xe]
      %v1120 = vrot.slane %v1104, 5
      %v1121 = vrot.slane %v1120, 4
      %v1122 = vrot.slane %v931, 5
      %v1123 = vsel %vm752, %v1121, %v1122
      %v1124 = vrot.slane %v1122, 4
      %v1125 = vrot.slane %v932, 5
      %v1126 = vsel %vm752, %v1124, %v1125
      %v1127 = vrot.slane %v1105, 5
      %v1128 = vrot.slane %v1127, 4
      %v1129 = vrot.slane %v934, 5
      %v1130 = vsel %vm752, %v1128, %v1129
      %v1131 = vrot.slane %v1129, 4
      %v1132 = vrot.slane %v935, 5
      %v1133 = vsel %vm752, %v1131, %v1132
      %v1134 = vrot.slane %v1106, 5
      %v1135 = vrot.slane %v1134, 4
      %v1136 = vrot.slane %v937, 5
      %v1137 = vsel %vm752, %v1135, %v1136
      %v1138 = vrot.slane %v1136, 4
      %v1139 = vrot.slane %v938, 5
      %v1140 = vsel %vm752, %v1138, %v1139
      %v1141 = vrot.slane %v1107, 5
      %v1142 = vrot.slane %v1141, 4
      %v1143 = vrot.slane %v940, 5
      %v1144 = vsel %vm752, %v1142, %v1143
      %v1145 = vrot.slane %v1143, 4
      %v1146 = vrot.slane %v941, 5
      %v1147 = vsel %vm752, %v1145, %v1146
      %s1148 = scalar_lea.vmem %s3, 10
      %v1149 = vld [vmem:[%s1148] sm:$0x3]
      %v1150 = vunpack.c.l.b16 %v1123
      %v1151 = vunpack.c.l.b16 %v1126
      %v1152 = vunpack.c.l.b16 %v1130
      %v1153 = vunpack.c.l.b16 %v1133
      %v1154 = vunpack.c.l.b16 %v1137
      %v1155 = vunpack.c.l.b16 %v1140
      %v1156 = vunpack.c.l.b16 %v1144
      %v1157 = vunpack.c.l.b16 %v1147
      %v1158 = vpack.c.b16 %v1151, %v1150
      %v1159 = vpack.c.b16 %v1153, %v1152
      %v1160 = vpack.c.b16 %v1155, %v1154
      %v1161 = vpack.c.b16 %v1157, %v1156
      %v1163 = vsel %vm628, %v1158, 0
      %v1166 = vsel %vm628, %v1159, 0
      %v1169 = vsel %vm628, %v1160, 0
      %v1172 = vsel %vm628, %v1161, 0
      %v1175 = vsel %vm641, %v1149, 0
      %1177 = vmatpush.bf16.msra.mxu0 0
      %1178 = vmatpush.bf16.msra.mxu0 0
      %1179 = vmatpush.bf16.msra.mxu0 0
      %1180 = vmatpush.bf16.msra.mxu0 0
      %1181 = vmatpush.bf16.msra.mxu0 0
      %1182 = vmatpush.bf16.msra.mxu0 0
      %1183 = vmatpush.bf16.msra.mxu0 0
      %1184 = vmatpush.bf16.msra.mxu0 %v1175
      %1185 = vmatmul.bf16.gmra.mxu0 %v1163
      %v1186 = vpop.f32.mrf.mxu0
      %v1187 = vadd.f32 0.0, %v1186
      %v1188 = vpop.f32.mrf.mxu0
      %v1189 = vadd.f32 0.0, %v1188
      %1190 = vmatmul.bf16.gmra.mxu0 %v1166
      %v1191 = vpop.f32.mrf.mxu0
      %v1192 = vadd.f32 0.0, %v1191
      %v1193 = vpop.f32.mrf.mxu0
      %v1194 = vadd.f32 0.0, %v1193
      %1195 = vmatmul.bf16.gmra.mxu0 %v1169
      %v1196 = vpop.f32.mrf.mxu0
      %v1197 = vadd.f32 0.0, %v1196
      %v1198 = vpop.f32.mrf.mxu0
      %v1199 = vadd.f32 0.0, %v1198
      %1200 = vmatmul.bf16.gmra.mxu0 %v1172
      %v1201 = vpop.f32.mrf.mxu0
      %v1202 = vadd.f32 0.0, %v1201
      %v1203 = vpop.f32.mrf.mxu0
      %v1204 = vadd.f32 0.0, %v1203
      %1205 = vdwg.mxu0
      %v1206 = vadd.f32 %v1096, %v1187
      %v1207 = vadd.f32 %v1097, %v1189
      %v1208 = vadd.f32 %v1098, %v1192
      %v1209 = vadd.f32 %v1099, %v1194
      %v1210 = vadd.f32 %v1100, %v1197
      %v1211 = vadd.f32 %v1101, %v1199
      %v1212 = vadd.f32 %v1102, %v1202
      %v1213 = vadd.f32 %v1103, %v1204
      %s1214 = scalar_lea.vmem [#allocation2], 24
      %v1215 = vld [vmem:[%s1214] sm:$0xf]
      %v1216 = vld [vmem:[%s1214 + $0x4] sm:$0xf]
      %v1217 = vld [vmem:[%s1214 + $0xc] sm:$0xf]
      %v1218 = vld [vmem:[%s1214 + $0x10] sm:$0xf]
      %v1219 = vld [vmem:[%s1214 + $0x18] sm:$0xf]
      %v1220 = vld [vmem:[%s1214 + $0x1c] sm:$0xf]
      %v1221 = vld [vmem:[%s1214 + $0x24] sm:$0xf]
      %v1222 = vld [vmem:[%s1214 + $0x28] sm:$0xf]
      %s1223 = scalar_lea.vmem %s3, 12
      %v1224 = vld [vmem:[%s1223] sm:$0x3]
      %v1233 = vunpack.c.l.b16 %v1215
      %v1234 = vunpack.c.l.b16 %v1216
      %v1235 = vunpack.c.l.b16 %v1217
      %v1236 = vunpack.c.l.b16 %v1218
      %v1237 = vunpack.c.l.b16 %v1219
      %v1238 = vunpack.c.l.b16 %v1220
      %v1239 = vunpack.c.l.b16 %v1221
      %v1240 = vunpack.c.l.b16 %v1222
      %v1241 = vpack.c.b16 %v1234, %v1233
      %v1242 = vpack.c.b16 %v1236, %v1235
      %v1243 = vpack.c.b16 %v1238, %v1237
      %v1244 = vpack.c.b16 %v1240, %v1239
      %v1246 = vsel %vm628, %v1241, 0
      %v1249 = vsel %vm628, %v1242, 0
      %v1252 = vsel %vm628, %v1243, 0
      %v1255 = vsel %vm628, %v1244, 0
      %v1258 = vsel %vm641, %v1224, 0
      %1260 = vmatpush.bf16.msra.mxu0 0
      %1261 = vmatpush.bf16.msra.mxu0 0
      %1262 = vmatpush.bf16.msra.mxu0 0
      %1263 = vmatpush.bf16.msra.mxu0 0
      %1264 = vmatpush.bf16.msra.mxu0 0
      %1265 = vmatpush.bf16.msra.mxu0 0
      %1266 = vmatpush.bf16.msra.mxu0 0
      %1267 = vmatpush.bf16.msra.mxu0 %v1258
      %1268 = vmatmul.bf16.gmra.mxu0 %v1246
      %v1269 = vpop.f32.mrf.mxu0
      %v1270 = vadd.f32 0.0, %v1269
      %v1271 = vpop.f32.mrf.mxu0
      %v1272 = vadd.f32 0.0, %v1271
      %1273 = vmatmul.bf16.gmra.mxu0 %v1249
      %v1274 = vpop.f32.mrf.mxu0
      %v1275 = vadd.f32 0.0, %v1274
      %v1276 = vpop.f32.mrf.mxu0
      %v1277 = vadd.f32 0.0, %v1276
      %1278 = vmatmul.bf16.gmra.mxu0 %v1252
      %v1279 = vpop.f32.mrf.mxu0
      %v1280 = vadd.f32 0.0, %v1279
      %v1281 = vpop.f32.mrf.mxu0
      %v1282 = vadd.f32 0.0, %v1281
      %1283 = vmatmul.bf16.gmra.mxu0 %v1255
      %v1284 = vpop.f32.mrf.mxu0
      %v1285 = vadd.f32 0.0, %v1284
      %v1286 = vpop.f32.mrf.mxu0
      %v1287 = vadd.f32 0.0, %v1286
      %1288 = vdwg.mxu0
      %v1289 = vadd.f32 %v1206, %v1270
      %v1290 = vadd.f32 %v1207, %v1272
      %v1291 = vadd.f32 %v1208, %v1275
      %v1292 = vadd.f32 %v1209, %v1277
      %v1293 = vadd.f32 %v1210, %v1280
      %v1294 = vadd.f32 %v1211, %v1282
      %v1295 = vadd.f32 %v1212, %v1285
      %v1296 = vadd.f32 %v1213, %v1287
      %v1297 = vld [vmem:[%s1214] sm:$0xf]
      %v1298 = vld [vmem:[%s1214 + $0x4] sm:$0xf]
      %v1299 = vld [vmem:[%s1214 + $0x8] sm:$0x1]
      %v1300 = vld [vmem:[%s1214 + $0xc] sm:$0xf]
      %v1301 = vld [vmem:[%s1214 + $0x10] sm:$0xf]
      %v1302 = vld [vmem:[%s1214 + $0x14] sm:$0x1]
      %v1303 = vld [vmem:[%s1214 + $0x18] sm:$0xf]
      %v1304 = vld [vmem:[%s1214 + $0x1c] sm:$0xf]
      %v1305 = vld [vmem:[%s1214 + $0x20] sm:$0x1]
      %v1306 = vld [vmem:[%s1214 + $0x24] sm:$0xf]
      %v1307 = vld [vmem:[%s1214 + $0x28] sm:$0xf]
      %v1308 = vld [vmem:[%s1214 + $0x2c] sm:$0x1]
      %v1310 = vshrl.u32 %v1297, 16
      %v1312 = vrot.slane %v1310, 4
      %v1313 = vshll.u32 %v1297, 16
      %v1315 = vrot.slane %v1313, 5
      %v1316 = vor.u32 %v1312, %v1315
      %v1317 = vrot.slane %v1316, 4
      %v1319 = vshll.u32 %v1298, 16
      %v1321 = vrot.slane %v1319, 5
      %v1322 = vsel %vm517, %v1317, %v1321
      %v1323 = vshrl.u32 %v1298, 16
      %v1325 = vrot.slane %v1323, 4
      %v1326 = vor.u32 %v1325, %v1321
      %v1327 = vrot.slane %v1326, 4
      %v1329 = vshll.u32 %v1299, 16
      %v1331 = vrot.slane %v1329, 5
      %v1332 = vsel %vm517, %v1327, %v1331
      %v1334 = vshrl.u32 %v1300, 16
      %v1336 = vrot.slane %v1334, 4
      %v1337 = vshll.u32 %v1300, 16
      %v1339 = vrot.slane %v1337, 5
      %v1340 = vor.u32 %v1336, %v1339
      %v1341 = vrot.slane %v1340, 4
      %v1343 = vshll.u32 %v1301, 16
      %v1345 = vrot.slane %v1343, 5
      %v1346 = vsel %vm517, %v1341, %v1345
      %v1347 = vshrl.u32 %v1301, 16
      %v1349 = vrot.slane %v1347, 4
      %v1350 = vor.u32 %v1349, %v1345
      %v1351 = vrot.slane %v1350, 4
      %v1353 = vshll.u32 %v1302, 16
      %v1355 = vrot.slane %v1353, 5
      %v1356 = vsel %vm517, %v1351, %v1355
      %v1358 = vshrl.u32 %v1303, 16
      %v1360 = vrot.slane %v1358, 4
      %v1361 = vshll.u32 %v1303, 16
      %v1363 = vrot.slane %v1361, 5
      %v1364 = vor.u32 %v1360, %v1363
      %v1365 = vrot.slane %v1364, 4
      %v1367 = vshll.u32 %v1304, 16
      %v1369 = vrot.slane %v1367, 5
      %v1370 = vsel %vm517, %v1365, %v1369
      %v1371 = vshrl.u32 %v1304, 16
      %v1373 = vrot.slane %v1371, 4
      %v1374 = vor.u32 %v1373, %v1369
      %v1375 = vrot.slane %v1374, 4
      %v1377 = vshll.u32 %v1305, 16
      %v1379 = vrot.slane %v1377, 5
      %v1380 = vsel %vm517, %v1375, %v1379
      %v1382 = vshrl.u32 %v1306, 16
      %v1384 = vrot.slane %v1382, 4
      %v1385 = vshll.u32 %v1306, 16
      %v1387 = vrot.slane %v1385, 5
      %v1388 = vor.u32 %v1384, %v1387
      %v1389 = vrot.slane %v1388, 4
      %v1391 = vshll.u32 %v1307, 16
      %v1393 = vrot.slane %v1391, 5
      %v1394 = vsel %vm517, %v1389, %v1393
      %v1395 = vshrl.u32 %v1307, 16
      %v1397 = vrot.slane %v1395, 4
      %v1398 = vor.u32 %v1397, %v1393
      %v1399 = vrot.slane %v1398, 4
      %v1401 = vshll.u32 %v1308, 16
      %v1403 = vrot.slane %v1401, 5
      %v1404 = vsel %vm517, %v1399, %v1403
      %s1405 = scalar_lea.vmem %s3, 14
      %v1406 = vld [vmem:[%s1405] sm:$0x3]
      %v1407 = vunpack.c.l.b16 %v1322
      %v1408 = vunpack.c.l.b16 %v1332
      %v1409 = vunpack.c.l.b16 %v1346
      %v1410 = vunpack.c.l.b16 %v1356
      %v1411 = vunpack.c.l.b16 %v1370
      %v1412 = vunpack.c.l.b16 %v1380
      %v1413 = vunpack.c.l.b16 %v1394
      %v1414 = vunpack.c.l.b16 %v1404
      %v1415 = vpack.c.b16 %v1408, %v1407
      %v1416 = vpack.c.b16 %v1410, %v1409
      %v1417 = vpack.c.b16 %v1412, %v1411
      %v1418 = vpack.c.b16 %v1414, %v1413
      %v1420 = vsel %vm628, %v1415, 0
      %v1423 = vsel %vm628, %v1416, 0
      %v1426 = vsel %vm628, %v1417, 0
      %v1429 = vsel %vm628, %v1418, 0
      %v1432 = vsel %vm641, %v1406, 0
      %1434 = vmatpush.bf16.msra.mxu0 0
      %1435 = vmatpush.bf16.msra.mxu0 0
      %1436 = vmatpush.bf16.msra.mxu0 0
      %1437 = vmatpush.bf16.msra.mxu0 0
      %1438 = vmatpush.bf16.msra.mxu0 0
      %1439 = vmatpush.bf16.msra.mxu0 0
      %1440 = vmatpush.bf16.msra.mxu0 0
      %1441 = vmatpush.bf16.msra.mxu0 %v1432
      %1442 = vmatmul.bf16.gmra.mxu0 %v1420
      %v1443 = vpop.f32.mrf.mxu0
      %v1444 = vadd.f32 0.0, %v1443
      %v1445 = vpop.f32.mrf.mxu0
      %v1446 = vadd.f32 0.0, %v1445
      %1447 = vmatmul.bf16.gmra.mxu0 %v1423
      %v1448 = vpop.f32.mrf.mxu0
      %v1449 = vadd.f32 0.0, %v1448
      %v1450 = vpop.f32.mrf.mxu0
      %v1451 = vadd.f32 0.0, %v1450
      %1452 = vmatmul.bf16.gmra.mxu0 %v1426
      %v1453 = vpop.f32.mrf.mxu0
      %v1454 = vadd.f32 0.0, %v1453
      %v1455 = vpop.f32.mrf.mxu0
      %v1456 = vadd.f32 0.0, %v1455
      %1457 = vmatmul.bf16.gmra.mxu0 %v1429
      %v1458 = vpop.f32.mrf.mxu0
      %v1459 = vadd.f32 0.0, %v1458
      %v1460 = vpop.f32.mrf.mxu0
      %v1461 = vadd.f32 0.0, %v1460
      %1462 = vdwg.mxu0
      %v1463 = vadd.f32 %v1289, %v1444
      %v1464 = vadd.f32 %v1290, %v1446
      %v1465 = vadd.f32 %v1291, %v1449
      %v1466 = vadd.f32 %v1292, %v1451
      %v1467 = vadd.f32 %v1293, %v1454
      %v1468 = vadd.f32 %v1294, %v1456
      %v1469 = vadd.f32 %v1295, %v1459
      %v1470 = vadd.f32 %v1296, %v1461
      %v1471 = vld [vmem:[%s1214] sm:$0xe]
      %v1472 = vld [vmem:[%s1214 + $0xc] sm:$0xe]
      %v1473 = vld [vmem:[%s1214 + $0x18] sm:$0xe]
      %v1474 = vld [vmem:[%s1214 + $0x24] sm:$0xe]
      %v1487 = vrot.slane %v1471, 5
      %v1488 = vrot.slane %v1487, 4
      %v1489 = vrot.slane %v1298, 5
      %v1490 = vsel %vm752, %v1488, %v1489
      %v1491 = vrot.slane %v1489, 4
      %v1492 = vrot.slane %v1299, 5
      %v1493 = vsel %vm752, %v1491, %v1492
      %v1494 = vrot.slane %v1472, 5
      %v1495 = vrot.slane %v1494, 4
      %v1496 = vrot.slane %v1301, 5
      %v1497 = vsel %vm752, %v1495, %v1496
      %v1498 = vrot.slane %v1496, 4
      %v1499 = vrot.slane %v1302, 5
      %v1500 = vsel %vm752, %v1498, %v1499
      %v1501 = vrot.slane %v1473, 5
      %v1502 = vrot.slane %v1501, 4
      %v1503 = vrot.slane %v1304, 5
      %v1504 = vsel %vm752, %v1502, %v1503
      %v1505 = vrot.slane %v1503, 4
      %v1506 = vrot.slane %v1305, 5
      %v1507 = vsel %vm752, %v1505, %v1506
      %v1508 = vrot.slane %v1474, 5
      %v1509 = vrot.slane %v1508, 4
      %v1510 = vrot.slane %v1307, 5
      %v1511 = vsel %vm752, %v1509, %v1510
      %v1512 = vrot.slane %v1510, 4
      %v1513 = vrot.slane %v1308, 5
      %v1514 = vsel %vm752, %v1512, %v1513
      %s1515 = scalar_lea.vmem %s3, 16
      %v1516 = vld [vmem:[%s1515] sm:$0x3]
      %v1517 = vunpack.c.l.b16 %v1490
      %v1518 = vunpack.c.l.b16 %v1493
      %v1519 = vunpack.c.l.b16 %v1497
      %v1520 = vunpack.c.l.b16 %v1500
      %v1521 = vunpack.c.l.b16 %v1504
      %v1522 = vunpack.c.l.b16 %v1507
      %v1523 = vunpack.c.l.b16 %v1511
      %v1524 = vunpack.c.l.b16 %v1514
      %v1525 = vpack.c.b16 %v1518, %v1517
      %v1526 = vpack.c.b16 %v1520, %v1519
      %v1527 = vpack.c.b16 %v1522, %v1521
      %v1528 = vpack.c.b16 %v1524, %v1523
      %v1530 = vsel %vm628, %v1525, 0
      %v1533 = vsel %vm628, %v1526, 0
      %v1536 = vsel %vm628, %v1527, 0
      %v1539 = vsel %vm628, %v1528, 0
      %v1542 = vsel %vm641, %v1516, 0
      %1544 = vmatpush.bf16.msra.mxu0 0
      %1545 = vmatpush.bf16.msra.mxu0 0
      %1546 = vmatpush.bf16.msra.mxu0 0
      %1547 = vmatpush.bf16.msra.mxu0 0
      %1548 = vmatpush.bf16.msra.mxu0 0
      %1549 = vmatpush.bf16.msra.mxu0 0
      %1550 = vmatpush.bf16.msra.mxu0 0
      %1551 = vmatpush.bf16.msra.mxu0 %v1542
      %1552 = vmatmul.bf16.gmra.mxu0 %v1530
      %v1553 = vpop.f32.mrf.mxu0
      %v1554 = vadd.f32 0.0, %v1553
      %v1555 = vpop.f32.mrf.mxu0
      %v1556 = vadd.f32 0.0, %v1555
      %1557 = vmatmul.bf16.gmra.mxu0 %v1533
      %v1558 = vpop.f32.mrf.mxu0
      %v1559 = vadd.f32 0.0, %v1558
      %v1560 = vpop.f32.mrf.mxu0
      %v1561 = vadd.f32 0.0, %v1560
      %1562 = vmatmul.bf16.gmra.mxu0 %v1536
      %v1563 = vpop.f32.mrf.mxu0
      %v1564 = vadd.f32 0.0, %v1563
      %v1565 = vpop.f32.mrf.mxu0
      %v1566 = vadd.f32 0.0, %v1565
      %1567 = vmatmul.bf16.gmra.mxu0 %v1539
      %v1568 = vpop.f32.mrf.mxu0
      %v1569 = vadd.f32 0.0, %v1568
      %v1570 = vpop.f32.mrf.mxu0
      %v1571 = vadd.f32 0.0, %v1570
      %1572 = vdwg.mxu0
      %v1573 = vadd.f32 %v1463, %v1554
      %v1574 = vadd.f32 %v1464, %v1556
      %v1575 = vadd.f32 %v1465, %v1559
      %v1576 = vadd.f32 %v1466, %v1561
      %v1577 = vadd.f32 %v1467, %v1564
      %v1578 = vadd.f32 %v1468, %v1566
      %v1579 = vadd.f32 %v1469, %v1569
      %v1580 = vadd.f32 %v1470, %v1571
      %v1581 = vpack.c.bf16 %v1573, %v1573
      %v1582 = vpack.c.bf16 %v1574, %v1574
      %v1583 = vpack.c.bf16 %v1575, %v1575
      %v1584 = vpack.c.bf16 %v1576, %v1576
      %v1585 = vpack.c.bf16 %v1577, %v1577
      %v1586 = vpack.c.bf16 %v1578, %v1578
      %v1587 = vpack.c.bf16 %v1579, %v1579
      %v1588 = vpack.c.bf16 %v1580, %v1580
      %1589 = vst [vmem:[%s445] sm:$0xf] %v1581
      %1590 = vst [vmem:[%s445 + $0x4] sm:$0xf] %v1582
      %1591 = vst [vmem:[%s445 + $0x8] sm:$0xf] %v1583
      %1592 = vst [vmem:[%s445 + $0xc] sm:$0xf] %v1584
      %1593 = vst [vmem:[%s445 + $0x10] sm:$0xf] %v1585
      %1594 = vst [vmem:[%s445 + $0x14] sm:$0xf] %v1586
      %1595 = vst [vmem:[%s445 + $0x18] sm:$0xf] %v1587
      %1596 = vst [vmem:[%s445 + $0x1c] sm:$0xf] %v1588
      %v1597 = vadd.f32 %v1573, %v1574
      %v1598 = vadd.f32 %v1597, %v1575
      %v1599 = vadd.f32 %v1598, %v1576
      %v1600 = vadd.f32 %v1599, %v1577
      %v1601 = vadd.f32 %v1600, %v1578
      %v1602 = vadd.f32 %v1601, %v1579
      %v1603 = vadd.f32 %v1602, %v1580
      %v1604 = vrot.slane %v1603, 4
      %v1605 = vadd.f32 %v1603, %v1604
      %v1606 = vrot.slane %v1605, 2
      %v1607 = vadd.f32 %v1605, %v1606
      %v1608 = vrot.slane %v1607, 1
      %v1609 = vadd.f32 %v1607, %v1608
      %v1610 = vmul.f32 %v1609, 0.015625
      %v1611 = vsub.f32 %v1573, %v1610
      %v1612 = vsub.f32 %v1574, %v1610
      %v1613 = vsub.f32 %v1575, %v1610
      %v1614 = vsub.f32 %v1576, %v1610
      %v1615 = vsub.f32 %v1577, %v1610
      %v1616 = vsub.f32 %v1578, %v1610
      %v1617 = vsub.f32 %v1579, %v1610
      %v1618 = vsub.f32 %v1580, %v1610
      %1619 = vst [vmem:[%s453] sm:$0x1] %v1609
      %v1620 = vmul.f32 %v1611, %v1611
      %v1621 = vmul.f32 %v1612, %v1612
      %v1622 = vmul.f32 %v1613, %v1613
      %v1623 = vmul.f32 %v1614, %v1614
      %v1624 = vmul.f32 %v1615, %v1615
      %v1625 = vmul.f32 %v1616, %v1616
      %v1626 = vmul.f32 %v1617, %v1617
      %v1627 = vmul.f32 %v1618, %v1618
      %v1628 = vadd.f32 %v1620, %v1621
      %v1629 = vadd.f32 %v1628, %v1622
      %v1630 = vadd.f32 %v1629, %v1623
      %v1631 = vadd.f32 %v1630, %v1624
      %v1632 = vadd.f32 %v1631, %v1625
      %v1633 = vadd.f32 %v1632, %v1626
      %v1634 = vadd.f32 %v1633, %v1627
      %v1635 = vrot.slane %v1634, 4
      %v1636 = vadd.f32 %v1634, %v1635
      %v1637 = vrot.slane %v1636, 2
      %v1638 = vadd.f32 %v1636, %v1637
      %v1639 = vrot.slane %v1638, 1
      %v1640 = vadd.f32 %v1638, %v1639
      %1641 = vst [vmem:[%s460] sm:$0x1] %v1640
      %s1642 = smul.u32 4, %s23
      %p1643 = scmp.lt.s32.totalorder %s22, 1
      %s1644 = scalar_select %p1643, %s22, 1
      %p1645 = scmp.lt.s32.totalorder %s1642, 15
      %s1646 = scalar_select %p1645, %s1642, 15
      %s1647 = smul.addr %s1646, 2
      %s1648 = smul.addr %s1644, 32
      %s1649 = sadd.s32 %s1647, %s1648
      %s1650 = smul.addr %s1649, 4
      %s1651 = scalar_lea.vmem %s4, %s1650
      %p1652 = scmp.lt.s32.totalorder %s22, 1
      %s1653 = scalar_select %p1652, %s22, 1
      %p1654 = scmp.lt.s32.totalorder %s23, 3
      %s1655 = scalar_select %p1654, %s23, 3
      %s1656 = smul.addr %s1653, 4
      %s1657 = sadd.s32 %s1655, %s1656
      %s1658 = scalar_lea.vmem %s5, %s1657
      %p1659 = scmp.lt.s32.totalorder %s22, 1
      %s1660 = scalar_select %p1659, %s22, 1
      %p1661 = scmp.lt.s32.totalorder %s23, 3
      %s1662 = scalar_select %p1661, %s23, 3
      %s1663 = smul.addr %s1660, 4
      %s1664 = sadd.s32 %s1662, %s1663
      %s1665 = scalar_lea.vmem %s6, %s1664
      // Predicated region
      $region37: #{conv_bn2d.2} parent=35 // pred_check
        %p1666 = pneg %p165
      $region38: #{conv_bn2d.2} parent=35 // pred_check_branch
        %1668 = sbr.rel (%p1666) target = $region40
      $region39: #{conv_bn2d.2} parent=35 // pred_region
        %s1669 = smul.u32 4, %s23
      $region40: #{conv_bn2d.2} parent=35 // pred_fallthru
        _
      // Predicated region
      $region41: #{conv_bn2d.2} parent=35 // pred_check
        %p1670 = pneg %p193
      $region42: #{conv_bn2d.2} parent=35 // pred_check_branch
        %1672 = sbr.rel (%p1670) target = $region44
      $region43: #{conv_bn2d.2} parent=35 // pred_region
        _
      $region44: #{conv_bn2d.2} parent=35 // pred_fallthru
        _
      // Predicated region
      $region45: #{conv_bn2d.2} parent=35 // pred_check
        %p1673 = pneg %p221
      $region46: #{conv_bn2d.2} parent=35 // pred_check_branch
        %1675 = sbr.rel (%p1673) target = $region48
      $region47: #{conv_bn2d.2} parent=35 // pred_region
        _
      $region48: #{conv_bn2d.2} parent=35 // pred_fallthru
        _
    $region36: #{conv_bn2d.2} parent=5 // pred_fallthru
      _
    %p1676 = scmp.le.s32.totalorder 2, %s13
    // Predicated region
    $region49: #{conv_bn2d.2} parent=5 // pred_check
      %p1677 = pneg %p1676
    $region50: #{conv_bn2d.2} parent=5 // pred_check_branch
      %1679 = sbr.rel (%p1677) target = $region52
    $region51: #{conv_bn2d.2} parent=5 // pred_region
      %s1680 = ssub.s32 %s13, 2
      // Predicated region
      $region53: #{conv_bn2d.2} parent=51 // pred_check
        %p1681 = pneg %p171
      $region54: #{conv_bn2d.2} parent=51 // pred_check_branch
        %1683 = sbr.rel (%p1681) target = $region56
      $region55: #{conv_bn2d.2} parent=51 // pred_region
        %s1684 = smul.u32 4, %s25
        %p1685 = scmp.lt.s32.totalorder %s24, 1
        %s1686 = scalar_select %p1685, %s24, 1
        %p1687 = scmp.lt.s32.totalorder %s1684, 15
        %s1688 = scalar_select %p1687, %s1684, 15
        %s1689 = smul.addr %s1688, 2
        %s1690 = smul.addr %s1686, 32
        %s1691 = sadd.s32 %s1689, %s1690
        %s1692 = smul.addr %s1691, 4
        %s1693 = scalar_lea.vmem %s4, %s1692
      $region56: #{conv_bn2d.2} parent=51 // pred_fallthru
        _
      // Predicated region
      $region57: #{conv_bn2d.2} parent=51 // pred_check
        %p1694 = pneg %p199
      $region58: #{conv_bn2d.2} parent=51 // pred_check_branch
        %1696 = sbr.rel (%p1694) target = $region60
      $region59: #{conv_bn2d.2} parent=51 // pred_region
        %p1697 = scmp.lt.s32.totalorder %s24, 1
        %s1698 = scalar_select %p1697, %s24, 1
        %p1699 = scmp.lt.s32.totalorder %s25, 3
        %s1700 = scalar_select %p1699, %s25, 3
        %s1701 = smul.addr %s1698, 4
        %s1702 = sadd.s32 %s1700, %s1701
        %s1703 = scalar_lea.vmem %s5, %s1702
      $region60: #{conv_bn2d.2} parent=51 // pred_fallthru
        _
      // Predicated region
      $region61: #{conv_bn2d.2} parent=51 // pred_check
        %p1704 = pneg %p227
      $region62: #{conv_bn2d.2} parent=51 // pred_check_branch
        %1706 = sbr.rel (%p1704) target = $region64
      $region63: #{conv_bn2d.2} parent=51 // pred_region
        %p1707 = scmp.lt.s32.totalorder %s24, 1
        %s1708 = scalar_select %p1707, %s24, 1
        %p1709 = scmp.lt.s32.totalorder %s25, 3
        %s1710 = scalar_select %p1709, %s25, 3
        %s1711 = smul.addr %s1708, 4
        %s1712 = sadd.s32 %s1710, %s1711
        %s1713 = scalar_lea.vmem %s6, %s1712
      $region64: #{conv_bn2d.2} parent=51 // pred_fallthru
        _
    $region52: #{conv_bn2d.2} parent=5 // pred_fallthru
      _
  $region6: #{conv_bn2d.2} parent=0 // loop_footer
    %s17 = sadd.s32 1, %s13
  $region7: #{conv_bn2d.2} parent=0 // loop_footer_branch
    %12 = sbr.rel target = $region3
  $region8: #{conv_bn2d.2} parent=0 // loop_exit
    _

</llo_original>
